<compile_context>
chip_gen: v7x
topology: tpu7x:2x2x1
jax: 0.10.0
libtpu: 0.0.40
codegen_flags: <defaults>
</compile_context>

<pallas_src>
from functools import partial

import jax
import jax.numpy as jnp
from jax import lax
from jax.experimental import pallas as pl
from jax.experimental.pallas import tpu as pltpu

NEG_SLOPE = 0.01          # nn.LeakyReLU default negative_slope
MIN_SPLIT = 4096          # split into >=2 grid tiles (v7x megacore) above this batch
X_STREAM_BUDGET = 20 * 1024 * 1024   # bytes for the double-buffered x stream


def _round_up(n, m):
    return ((n + m - 1) // m) * m


def _leaky_relu(x):
    # max(x, 0.01*x) == LeakyReLU(0.01) for slope < 1; one VALU op cheaper than where().
    return jnp.maximum(x, NEG_SLOPE * x)


def _forward_rows(rows, w1, b1, w2, b2, w3, b3, w4t, b4):
    """4-layer MLP on `rows` (n, F); returns (1, n) with batch on the lane axis."""
    h = jnp.dot(rows.astype(w1.dtype), w1, preferred_element_type=jnp.float32) + b1
    h = _leaky_relu(h)
    h = jnp.dot(h.astype(w2.dtype), w2, preferred_element_type=jnp.float32) + b2
    h = _leaky_relu(h)
    h = jnp.dot(h.astype(w3.dtype), w3, preferred_element_type=jnp.float32) + b3
    h = _leaky_relu(h)
    # Final Linear(10 -> 1) computed transposed: (1,10) . (n,10)^T -> (1, n),
    # so the per-chunk result is lane-dense (dense vector stores).
    out = lax.dot_general(w4t, h.astype(w4t.dtype),
                          dimension_numbers=(((1,), (1,)), ((), ())),
                          preferred_element_type=jnp.float32)
    return out + b4          # b4 is an SMEM scalar, broadcasts over lanes


def _mlp_kernel_single(x_ref, w1_ref, b1_ref, w2_ref, b2_ref, w3_ref, b3_ref,
                       w4t_ref, b4_ref, o_ref):
    """Single full-array tile (small B): one shot, output block (1, B)."""
    o_ref[...] = _forward_rows(
        x_ref[...], w1_ref[...], b1_ref[...], w2_ref[...], b2_ref[...],
        w3_ref[...], b3_ref[...], w4t_ref[...], b4_ref[0, 0],
    ).astype(o_ref.dtype)


def _mlp_kernel_chunked(x_ref, w1_ref, b1_ref, w2_ref, b2_ref, w3_ref, b3_ref,
                        w4t_ref, b4_ref, o_ref, *, chunk, num_chunks):
    """Large batch tile processed in `num_chunks` row sub-chunks of `chunk` rows.

    Output block is (1, num_chunks, chunk): chunk c writes sublane-row c, so no
    dynamic lane-dimension stores are needed and intermediates stay O(chunk).
    """
    # Hoist parameter loads out of the chunk loop.
    w1 = w1_ref[...]; b1 = b1_ref[...]
    w2 = w2_ref[...]; b2 = b2_ref[...]
    w3 = w3_ref[...]; b3 = b3_ref[...]
    w4t = w4t_ref[...]
    b4 = b4_ref[0, 0]

    def body(c, carry):
        start = pl.multiple_of(c * chunk, chunk)
        rows = x_ref[pl.ds(start, chunk), :]
        out = _forward_rows(rows, w1, b1, w2, b2, w3, b3, w4t, b4)   # (1, chunk)
        o_ref[:, pl.ds(c, 1), :] = out[:, None, :].astype(o_ref.dtype)
        return carry

    # Rolled-with-mild-unroll: bounds live intermediates to ~2 chunks while still
    # letting the scheduler overlap adjacent chunks.
    lax.fori_loop(0, num_chunks, body, 0, unroll=2)


def _const_spec(arr):
    # Full-array block, constant index map -> stays VMEM-resident across grid steps.
    return pl.BlockSpec(arr.shape, lambda i: (0,) * arr.ndim)


def regression_nn_forward(x, params, *, tile_b=16384, chunk_rows=512,
                          matmul_dtype=None):
    """x: (B, input_size) f32. Returns (B,) f32 (matches model(x).squeeze(axis=1))."""
    (w1, b1), (w2, b2), (w3, b3), (w4, b4) = params
    B, F = x.shape
    H1, H2, H3 = w1.shape[1], w2.shape[1], w3.shape[1]

    # Parameter shaping: biases as (1, H) rows; final layer transposed to (1, 10);
    # final bias as a (1, 1) SMEM scalar.
    b1 = b1.reshape(1, H1)
    b2 = b2.reshape(1, H2)
    b3 = b3.reshape(1, H3)
    w4t = w4.reshape(H3, 1).T                      # (1, H3)
    b4s = jnp.asarray(b4, jnp.float32).reshape(1, 1)
    if matmul_dtype is not None:
        # Optional (v6e/v7x): bf16 matmul inputs; NOT bit-exact vs the f32 reference.
        w1, w2, w3, w4t = (w.astype(matmul_dtype) for w in (w1, w2, w3, w4t))

    # ---- tiling selection ---------------------------------------------------
    LANE = 128
    CH = max(8, _round_up(int(chunk_rows), 8))     # sub-chunk rows (sublane aligned)
    F_pad = _round_up(F, LANE)                     # x rows are lane-padded in VMEM
    # Cap the double-buffered x stream so the whole kernel fits v7x's scoped VMEM.
    cap_rows = max(CH, (X_STREAM_BUDGET // (2 * 4 * F_pad)) // CH * CH)
    tb_goal = max(CH, (min(int(tile_b), cap_rows) // CH) * CH)

    dims = (F, H1, H2, H3, 1)
    flops = 2 * B * sum(a * b for a, b in zip(dims[:-1], dims[1:]))
    bytes_accessed = 4 * (B * F + B + sum(a * b + b for a, b in zip(dims[:-1], dims[1:])))
    cost = pl.CostEstimate(flops=flops, transcendentals=0,
                           bytes_accessed=bytes_accessed)
    cparams = pltpu.CompilerParams(
        dimension_semantics=("parallel",),
        vmem_limit_bytes=32 * 1024 * 1024,   # safe on v5e/v6e (128 MiB) and v7x (64 MiB)
    )
    smem_spec = pl.BlockSpec(memory_space=pltpu.MemorySpace.SMEM)
    param_specs = [_const_spec(w1), _const_spec(b1),
                   _const_spec(w2), _const_spec(b2),
                   _const_spec(w3), _const_spec(b3),
                   _const_spec(w4t), smem_spec]
    args = (x, w1, b1, w2, b2, w3, b3, w4t, b4s)

    if B <= CH or (B <= tb_goal and B < MIN_SPLIT):
        # Small batch: one full-array tile, single chunk, no padding/masking needed.
        out = pl.pallas_call(
            _mlp_kernel_single,
            grid=(1,),
            out_shape=jax.ShapeDtypeStruct((1, B), jnp.float32),
            in_specs=[pl.BlockSpec((B, F), lambda i: (0, 0)), *param_specs],
            out_specs=pl.BlockSpec((1, B), lambda i: (0, 0)),
            compiler_params=cparams,
            cost_estimate=cost,
        )(*args)
        return out[0]

    # Large batch: big tiles of TB = cpt * CH rows, >= 2 tiles for megacore,
    # ragged last tile handled by partial-block DMA (no jnp.pad copy of x).
    tb_target = min(tb_goal, _round_up(pl.cdiv(B, 2), CH))
    cpt = max(1, tb_target // CH)
    TB = cpt * CH
    G = pl.cdiv(B, TB)
    out = pl.pallas_call(
        partial(_mlp_kernel_chunked, chunk=CH, num_chunks=cpt),
        grid=(G,),
        out_shape=jax.ShapeDtypeStruct((G, cpt, CH), jnp.float32),
        in_specs=[pl.BlockSpec((TB, F), lambda i: (i, 0)), *param_specs],
        out_specs=pl.BlockSpec((1, cpt, CH), lambda i: (i, 0, 0)),
        compiler_params=cparams,
        cost_estimate=cost,
    )(*args)
    return out.reshape(-1)[:B]                    # drop the ragged-tile overhang


# ------------------------------ reference / demo ------------------------------

def init_params(key, input_size, neurons_per_layer=(40, 20, 10), output_size=1):
    """Deterministic synthetic init matching PyTorch Linear shapes.
    Weights stored as (in, out); biases as (1, out)."""
    dims = [input_size, *neurons_per_layer, output_size]
    params = []
    for i in range(len(dims) - 1):
        key, kw, kb = jax.random.split(key, 3)
        fan_in, fan_out = dims[i], dims[i + 1]
        bound = 1.0 / (fan_in ** 0.5)
        w = jax.random.uniform(kw, (fan_in, fan_out), jnp.float32, -bound, bound)
        b = jax.random.uniform(kb, (1, fan_out), jnp.float32, -bound, bound)
        params.append((w, b))
    return params


def reference_forward(x, params):
    """Pure-JAX reference of the same forward pass."""
    h = x
    for i, (w, b) in enumerate(params):
        h = jnp.dot(h, w, precision=lax.Precision.HIGHEST) + b
        if i < len(params) - 1:
            h = _leaky_relu(h)
    return h[:, 0]


if __name__ == "__main__":
    key = jax.random.PRNGKey(0)
    kx1, kx2, kp = jax.random.split(key, 3)

    input_size = 16
    params = init_params(kp, input_size)

    # Case 1: small batch -> single full-array tile path.
    x1 = jax.random.normal(kx1, (300, input_size), jnp.float32)
    out1 = jax.block_until_ready(regression_nn_forward(x1, params))
    ref1 = reference_forward(x1, params)
    assert out1.shape == (300,), out1.shape
    assert jnp.allclose(out1, ref1, atol=1e-4, rtol=1e-4)

    # Case 2: force the tiled + in-kernel-chunked path (small overrides keep it
    # cheap) including a ragged final tile and multiple grid steps.
    x2 = jax.random.normal(kx2, (1200, input_size), jnp.float32)
    out2 = jax.block_until_ready(
        regression_nn_forward(x2, params, tile_b=512, chunk_rows=128))
    ref2 = reference_forward(x2, params)
    assert out2.shape == (1200,), out2.shape
    assert jnp.allclose(out2, ref2, atol=1e-4, rtol=1e-4)

    print("KERNEL_OK")
</pallas_src>

<mosaic_0001>
module attributes {stable_mosaic.version = 11 : i64} {
  func.func @_mlp_kernel_single(%arg0: i32, %arg1: memref<300x16xf32, #tpu.memory_space<vmem>>, %arg2: memref<16x40xf32, #tpu.memory_space<vmem>>, %arg3: memref<1x40xf32, #tpu.memory_space<vmem>>, %arg4: memref<40x20xf32, #tpu.memory_space<vmem>>, %arg5: memref<1x20xf32, #tpu.memory_space<vmem>>, %arg6: memref<20x10xf32, #tpu.memory_space<vmem>>, %arg7: memref<1x10xf32, #tpu.memory_space<vmem>>, %arg8: memref<1x10xf32, #tpu.memory_space<vmem>>, %arg9: memref<1x1xf32, #tpu.memory_space<smem>>, %arg10: memref<1x300xf32, #tpu.memory_space<vmem>>) attributes {dimension_semantics = [#tpu.dimension_semantics<parallel>], iteration_bounds = array<i64: 1>, scalar_prefetch = 0 : i64, scratch_operands = 0 : i64, tpu.core_type = #tpu.core_type<tc>, window_params = [{pipeline_mode = #tpu.pipeline_mode<synchronous>, transform_indices = @transform_0, window_bounds = array<i64: 300, 16>}, {pipeline_mode = #tpu.pipeline_mode<synchronous>, transform_indices = @transform_1, window_bounds = array<i64: 16, 40>}, {pipeline_mode = #tpu.pipeline_mode<synchronous>, transform_indices = @transform_2, window_bounds = array<i64: 1, 40>}, {pipeline_mode = #tpu.pipeline_mode<synchronous>, transform_indices = @transform_3, window_bounds = array<i64: 40, 20>}, {pipeline_mode = #tpu.pipeline_mode<synchronous>, transform_indices = @transform_4, window_bounds = array<i64: 1, 20>}, {pipeline_mode = #tpu.pipeline_mode<synchronous>, transform_indices = @transform_5, window_bounds = array<i64: 20, 10>}, {pipeline_mode = #tpu.pipeline_mode<synchronous>, transform_indices = @transform_6, window_bounds = array<i64: 1, 10>}, {pipeline_mode = #tpu.pipeline_mode<synchronous>, transform_indices = @transform_7, window_bounds = array<i64: 1, 10>}, {transform_indices = @transform_8, window_bounds = array<i64: 1, 1>}, {pipeline_mode = #tpu.pipeline_mode<synchronous>, transform_indices = @transform_9, window_bounds = array<i64: 1, 300>}]} {
    %c0 = arith.constant 0 : index
    %c0_0 = arith.constant 0 : index
    %0 = vector.load %arg1[%c0, %c0_0] : memref<300x16xf32, #tpu.memory_space<vmem>>, vector<300x16xf32>
    %c0_1 = arith.constant 0 : index
    %c0_2 = arith.constant 0 : index
    %1 = vector.load %arg2[%c0_1, %c0_2] : memref<16x40xf32, #tpu.memory_space<vmem>>, vector<16x40xf32>
    %c0_3 = arith.constant 0 : index
    %c0_4 = arith.constant 0 : index
    %2 = vector.load %arg3[%c0_3, %c0_4] : memref<1x40xf32, #tpu.memory_space<vmem>>, vector<1x40xf32>
    %c0_5 = arith.constant 0 : index
    %c0_6 = arith.constant 0 : index
    %3 = vector.load %arg4[%c0_5, %c0_6] : memref<40x20xf32, #tpu.memory_space<vmem>>, vector<40x20xf32>
    %c0_7 = arith.constant 0 : index
    %c0_8 = arith.constant 0 : index
    %4 = vector.load %arg5[%c0_7, %c0_8] : memref<1x20xf32, #tpu.memory_space<vmem>>, vector<1x20xf32>
    %c0_9 = arith.constant 0 : index
    %c0_10 = arith.constant 0 : index
    %5 = vector.load %arg6[%c0_9, %c0_10] : memref<20x10xf32, #tpu.memory_space<vmem>>, vector<20x10xf32>
    %c0_11 = arith.constant 0 : index
    %c0_12 = arith.constant 0 : index
    %6 = vector.load %arg7[%c0_11, %c0_12] : memref<1x10xf32, #tpu.memory_space<vmem>>, vector<1x10xf32>
    %c0_13 = arith.constant 0 : index
    %c0_14 = arith.constant 0 : index
    %7 = vector.load %arg8[%c0_13, %c0_14] : memref<1x10xf32, #tpu.memory_space<vmem>>, vector<1x10xf32>
    %c0_15 = arith.constant 0 : index
    %c0_16 = arith.constant 0 : index
    %8 = memref.load %arg9[%c0_15, %c0_16] : memref<1x1xf32, #tpu.memory_space<smem>>
    %cst = arith.constant dense<0.000000e+00> : vector<300x40xf32>
    %9 = tpu.matmul %0, %1, %cst {dimension_numbers = #tpu.dot_dimension_numbers<[1], [0], [0], [1], [0, 0, 1, 1], [], []>} : vector<300x16xf32>, vector<16x40xf32>, vector<300x40xf32> -> vector<300x40xf32>
    %10 = vector.broadcast %2 : vector<1x40xf32> to vector<300x40xf32>
    %11 = arith.addf %9, %10 : vector<300x40xf32>
    %cst_17 = arith.constant 0.00999999977 : f32
    %12 = vector.broadcast %cst_17 : f32 to vector<300x40xf32>
    %13 = arith.mulf %12, %11 : vector<300x40xf32>
    %14 = arith.maximumf %11, %13 : vector<300x40xf32>
    %cst_18 = arith.constant dense<0.000000e+00> : vector<300x20xf32>
    %15 = tpu.matmul %14, %3, %cst_18 {dimension_numbers = #tpu.dot_dimension_numbers<[1], [0], [0], [1], [0, 0, 1, 1], [], []>} : vector<300x40xf32>, vector<40x20xf32>, vector<300x20xf32> -> vector<300x20xf32>
    %16 = vector.broadcast %4 : vector<1x20xf32> to vector<300x20xf32>
    %17 = arith.addf %15, %16 : vector<300x20xf32>
    %cst_19 = arith.constant 0.00999999977 : f32
    %18 = vector.broadcast %cst_19 : f32 to vector<300x20xf32>
    %19 = arith.mulf %18, %17 : vector<300x20xf32>
    %20 = arith.maximumf %17, %19 : vector<300x20xf32>
    %cst_20 = arith.constant dense<0.000000e+00> : vector<300x10xf32>
    %21 = tpu.matmul %20, %5, %cst_20 {dimension_numbers = #tpu.dot_dimension_numbers<[1], [0], [0], [1], [0, 0, 1, 1], [], []>} : vector<300x20xf32>, vector<20x10xf32>, vector<300x10xf32> -> vector<300x10xf32>
    %22 = vector.broadcast %6 : vector<1x10xf32> to vector<300x10xf32>
    %23 = arith.addf %21, %22 : vector<300x10xf32>
    %cst_21 = arith.constant 0.00999999977 : f32
    %24 = vector.broadcast %cst_21 : f32 to vector<300x10xf32>
    %25 = arith.mulf %24, %23 : vector<300x10xf32>
    %26 = arith.maximumf %23, %25 : vector<300x10xf32>
    %cst_22 = arith.constant dense<0.000000e+00> : vector<1x300xf32>
    %27 = tpu.matmul %7, %26, %cst_22 {dimension_numbers = #tpu.dot_dimension_numbers<[1], [1], [0], [0], [0, 0, 1, 0], [], []>} : vector<1x10xf32>, vector<300x10xf32>, vector<1x300xf32> -> vector<1x300xf32>
    %28 = vector.broadcast %8 : f32 to vector<1x300xf32>
    %29 = arith.addf %27, %28 : vector<1x300xf32>
    %c0_23 = arith.constant 0 : index
    %c0_24 = arith.constant 0 : index
    %30 = vector.load %arg10[%c0_23, %c0_24] : memref<1x300xf32, #tpu.memory_space<vmem>>, vector<1x300xf32>
    tpu.vector_store %arg10[%c0_23, %c0_24], %29 {strides = array<i32>} : memref<1x300xf32, #tpu.memory_space<vmem>>, vector<1x300xf32>,
    return
  }
  func.func @transform_0(%arg0: i32) -> (i32, i32) {
    %c0_i32 = arith.constant 0 : i32
    %c0_i32_0 = arith.constant 0 : i32
    %c0_i32_1 = arith.constant 0 : i32
    return %c0_i32, %c0_i32_0 : i32, i32
  }
  func.func @transform_1(%arg0: i32) -> (i32, i32) {
    %c0_i32 = arith.constant 0 : i32
    %c0_i32_0 = arith.constant 0 : i32
    %c0_i32_1 = arith.constant 0 : i32
    return %c0_i32, %c0_i32_0 : i32, i32
  }
  func.func @transform_2(%arg0: i32) -> (i32, i32) {
    %c0_i32 = arith.constant 0 : i32
    %c0_i32_0 = arith.constant 0 : i32
    %c0_i32_1 = arith.constant 0 : i32
    return %c0_i32, %c0_i32_0 : i32, i32
  }
  func.func @transform_3(%arg0: i32) -> (i32, i32) {
    %c0_i32 = arith.constant 0 : i32
    %c0_i32_0 = arith.constant 0 : i32
    %c0_i32_1 = arith.constant 0 : i32
    return %c0_i32, %c0_i32_0 : i32, i32
  }
  func.func @transform_4(%arg0: i32) -> (i32, i32) {
    %c0_i32 = arith.constant 0 : i32
    %c0_i32_0 = arith.constant 0 : i32
    %c0_i32_1 = arith.constant 0 : i32
    return %c0_i32, %c0_i32_0 : i32, i32
  }
  func.func @transform_5(%arg0: i32) -> (i32, i32) {
    %c0_i32 = arith.constant 0 : i32
    %c0_i32_0 = arith.constant 0 : i32
    %c0_i32_1 = arith.constant 0 : i32
    return %c0_i32, %c0_i32_0 : i32, i32
  }
  func.func @transform_6(%arg0: i32) -> (i32, i32) {
    %c0_i32 = arith.constant 0 : i32
    %c0_i32_0 = arith.constant 0 : i32
    %c0_i32_1 = arith.constant 0 : i32
    return %c0_i32, %c0_i32_0 : i32, i32
  }
  func.func @transform_7(%arg0: i32) -> (i32, i32) {
    %c0_i32 = arith.constant 0 : i32
    %c0_i32_0 = arith.constant 0 : i32
    %c0_i32_1 = arith.constant 0 : i32
    return %c0_i32, %c0_i32_0 : i32, i32
  }
  func.func @transform_8(%arg0: i32) -> (i32, i32) {
    %c0_i32 = arith.constant 0 : i32
    %c0_i32_0 = arith.constant 0 : i32
    %c0_i32_1 = arith.constant 0 : i32
    return %c0_i32, %c0_i32_0 : i32, i32
  }
  func.func @transform_9(%arg0: i32) -> (i32, i32) {
    %c0_i32 = arith.constant 0 : i32
    %c0_i32_0 = arith.constant 0 : i32
    %c0_i32_1 = arith.constant 0 : i32
    return %c0_i32, %c0_i32_0 : i32, i32
  }
}

</mosaic_0001>

<llo_original>
// kernel: tpu_custom_call.1
$region0: #{tpu_custom_call.1}
  #allocation0 [shape = 'u32[]', space=smem, size = 0x4, offset = 0x4, fixed_abs, tag = 'smem constant byte address 0x4 - core index']
  #allocation1 [shape = 'u32[144,128]{1,0:T(1,128)}', space=vmem, size = 0x12000, scoped, tag = 'internal scratch']
  #allocation2 [shape = 'f32[1,1]{1,0:T(1,128)S(6)}', space=smem, size = 0x200, scoped, tag = 'scoped memory for tpu_custom_call.1']
  %s0 = inlined_call_operand.vmem [shape: f32[300,16], index: 0, kind: input, shape index: {}]
  %s1 = inlined_call_operand.vmem [shape: f32[16,40], index: 1, kind: input, shape index: {}]
  %s2 = inlined_call_operand.vmem [shape: f32[1,40], index: 2, kind: input, shape index: {}]
  %s3 = inlined_call_operand.vmem [shape: f32[40,20], index: 3, kind: input, shape index: {}]
  %s4 = inlined_call_operand.vmem [shape: f32[1,20], index: 4, kind: input, shape index: {}]
  %s5 = inlined_call_operand.vmem [shape: f32[20,10], index: 5, kind: input, shape index: {}]
  %s6 = inlined_call_operand.vmem [shape: f32[1,10], index: 6, kind: input, shape index: {}]
  %s7 = inlined_call_operand.vmem [shape: f32[1,10], index: 7, kind: input, shape index: {}]
  %s8 = inlined_call_operand.<no memory space> [shape: f32[1,1], index: 8, kind: input, shape index: {}]
  %s9 = inlined_call_operand.hbm [shape: f32[1,300], index: 9, kind: output, shape index: {}]
  %s10 = sld [smem:[#allocation0]]
  $region46: #{tpu_custom_call.1} parent=0
    _
  %s12 = ssub.s32 1, %s10
  %s13 = scalar_select 0, %s12, %s10
  %14 = sst [smem:[#allocation2]] %s8
  $region1: #{tpu_custom_call.1} parent=0
    #allocation3 [shape = 'u8[1536]{0}', space=vmem, size = 0x800, scoped, tag = 'output window, operand 0, single buffered']
    #allocation4 [shape = 's32[1]{0}', space=sflag, size = 0x4, scoped, tag = 'scoped memory for tpu_custom_call.1']
    %15 = vsyncpa [#allocation4], 0
    // Predicated region
    $region2: #{tpu_custom_call.1} parent=1 // pred_check
      _
    $region3: #{tpu_custom_call.1} parent=1 // pred_check_branch
      %17 = sbr.rel (0) target = $region5
    $region4: #{tpu_custom_call.1} parent=1 // pred_region
      _
    $region5: #{tpu_custom_call.1} parent=1 // pred_fallthru
      _
    // Predicated region
    $region6: #{tpu_custom_call.1} parent=1 // pred_check
      _
    $region7: #{tpu_custom_call.1} parent=1 // pred_check_branch
      %19 = sbr.rel (0) target = $region9
    $region8: #{tpu_custom_call.1} parent=1 // pred_region
      _
    $region9: #{tpu_custom_call.1} parent=1 // pred_fallthru
      _
    // Predicated region
    $region10: #{tpu_custom_call.1} parent=1 // pred_check
      _
    $region11: #{tpu_custom_call.1} parent=1 // pred_check_branch
      %21 = sbr.rel (0) target = $region13
    $region12: #{tpu_custom_call.1} parent=1 // pred_region
      _
    $region13: #{tpu_custom_call.1} parent=1 // pred_fallthru
      _
    // Predicated region
    $region14: #{tpu_custom_call.1} parent=1 // pred_check
      _
    $region15: #{tpu_custom_call.1} parent=1 // pred_check_branch
      %23 = sbr.rel (0) target = $region17
    $region16: #{tpu_custom_call.1} parent=1 // pred_region
      _
    $region17: #{tpu_custom_call.1} parent=1 // pred_fallthru
      _
    // Predicated region
    $region18: #{tpu_custom_call.1} parent=1 // pred_check
      _
    $region19: #{tpu_custom_call.1} parent=1 // pred_check_branch
      %25 = sbr.rel (0) target = $region21
    $region20: #{tpu_custom_call.1} parent=1 // pred_region
      _
    $region21: #{tpu_custom_call.1} parent=1 // pred_fallthru
      _
    // Predicated region
    $region22: #{tpu_custom_call.1} parent=1 // pred_check
      _
    $region23: #{tpu_custom_call.1} parent=1 // pred_check_branch
      %27 = sbr.rel (0) target = $region25
    $region24: #{tpu_custom_call.1} parent=1 // pred_region
      _
    $region25: #{tpu_custom_call.1} parent=1 // pred_fallthru
      _
    // Predicated region
    $region26: #{tpu_custom_call.1} parent=1 // pred_check
      _
    $region27: #{tpu_custom_call.1} parent=1 // pred_check_branch
      %29 = sbr.rel (0) target = $region29
    $region28: #{tpu_custom_call.1} parent=1 // pred_region
      _
    $region29: #{tpu_custom_call.1} parent=1 // pred_fallthru
      _
    // Predicated region
    $region30: #{tpu_custom_call.1} parent=1 // pred_check
      _
    $region31: #{tpu_custom_call.1} parent=1 // pred_check_branch
      %31 = sbr.rel (0) target = $region33
    $region32: #{tpu_custom_call.1} parent=1 // pred_region
      _
    $region33: #{tpu_custom_call.1} parent=1 // pred_fallthru
      _
    // Predicated region
    $region34: #{tpu_custom_call.1} parent=1 // pred_check
      _
    $region35: #{tpu_custom_call.1} parent=1 // pred_check_branch
      %33 = sbr.rel (0) target = $region37
    $region36: #{tpu_custom_call.1} parent=1 // pred_region
      _
    $region37: #{tpu_custom_call.1} parent=1 // pred_fallthru
      _
    %v34 = vld [vmem:[%s0] sm:$0xff]
    %v35 = vld [vmem:[%s0 + $0x8] sm:$0xff]
    %v36 = vld [vmem:[%s0 + $0x10] sm:$0xff]
    %v37 = vld [vmem:[%s0 + $0x18] sm:$0xff]
    %v38 = vld [vmem:[%s0 + $0x20] sm:$0xff]
    %v39 = vld [vmem:[%s0 + $0x28] sm:$0xff]
    %v40 = vld [vmem:[%s0 + $0x30] sm:$0xff]
    %v41 = vld [vmem:[%s0 + $0x38] sm:$0xff]
    %v42 = vld [vmem:[%s0 + $0x40] sm:$0xff]
    %v43 = vld [vmem:[%s0 + $0x48] sm:$0xff]
    %v44 = vld [vmem:[%s0 + $0x50] sm:$0xff]
    %v45 = vld [vmem:[%s0 + $0x58] sm:$0xff]
    %v46 = vld [vmem:[%s0 + $0x60] sm:$0xff]
    %v47 = vld [vmem:[%s0 + $0x68] sm:$0xff]
    %v48 = vld [vmem:[%s0 + $0x70] sm:$0xff]
    %v49 = vld [vmem:[%s0 + $0x78] sm:$0xff]
    %v50 = vld [vmem:[%s0 + $0x80] sm:$0xff]
    %v51 = vld [vmem:[%s0 + $0x88] sm:$0xff]
    %v52 = vld [vmem:[%s0 + $0x90] sm:$0xff]
    %v53 = vld [vmem:[%s0 + $0x98] sm:$0xff]
    %v54 = vld [vmem:[%s0 + $0xa0] sm:$0xff]
    %v55 = vld [vmem:[%s0 + $0xa8] sm:$0xff]
    %v56 = vld [vmem:[%s0 + $0xb0] sm:$0xff]
    %v57 = vld [vmem:[%s0 + $0xb8] sm:$0xff]
    %v58 = vld [vmem:[%s0 + $0xc0] sm:$0xff]
    %v59 = vld [vmem:[%s0 + $0xc8] sm:$0xff]
    %v60 = vld [vmem:[%s0 + $0xd0] sm:$0xff]
    %v61 = vld [vmem:[%s0 + $0xd8] sm:$0xff]
    %v62 = vld [vmem:[%s0 + $0xe0] sm:$0xff]
    %v63 = vld [vmem:[%s0 + $0xe8] sm:$0xff]
    %v64 = vld [vmem:[%s0 + $0xf0] sm:$0xff]
    %v65 = vld [vmem:[%s0 + $0xf8] sm:$0xff]
    %v66 = vld [vmem:[%s0 + $0x100] sm:$0xff]
    %v67 = vld [vmem:[%s0 + $0x108] sm:$0xff]
    %v68 = vld [vmem:[%s0 + $0x110] sm:$0xff]
    %v69 = vld [vmem:[%s0 + $0x118] sm:$0xff]
    %v70 = vld [vmem:[%s0 + $0x120] sm:$0xff]
    %v71 = vld [vmem:[%s0 + $0x128] sm:$0xf]
    %v72 = vld [vmem:[%s1] sm:$0xff]
    %v73 = vld [vmem:[%s1 + $0x8] sm:$0xff]
    %v74 = vld [vmem:[%s2] sm:$0x1]
    %v75 = vld [vmem:[%s3] sm:$0xff]
    %v76 = vld [vmem:[%s3 + $0x8] sm:$0xff]
    %v77 = vld [vmem:[%s3 + $0x10] sm:$0xff]
    %v78 = vld [vmem:[%s3 + $0x18] sm:$0xff]
    %v79 = vld [vmem:[%s3 + $0x20] sm:$0xff]
    %v80 = vld [vmem:[%s4] sm:$0x1]
    %v81 = vld [vmem:[%s5] sm:$0xff]
    %v82 = vld [vmem:[%s5 + $0x8] sm:$0xff]
    %v83 = vld [vmem:[%s5 + $0x10] sm:$0xf]
    %v84 = vld [vmem:[%s6] sm:$0x1]
    %v85 = vld [vmem:[%s7] sm:$0x1]
    %s86 = sld [smem:[#allocation2]]
    %v88 = vlaneseq
    %v89 = vshrl.u32 %v88, 7
    %v90 = vsub.s32 0, %v89
    %v91 = vrot.slane %v74, %v90
    %vm93 = vcmask 130048
    %v95 = vsel %vm93, %v34, 0
    %v98 = vsel %vm93, %v35, 0
    %v101 = vsel %vm93, %v36, 0
    %v104 = vsel %vm93, %v37, 0
    %v107 = vsel %vm93, %v38, 0
    %v110 = vsel %vm93, %v39, 0
    %v113 = vsel %vm93, %v40, 0
    %v116 = vsel %vm93, %v41, 0
    %v119 = vsel %vm93, %v42, 0
    %v122 = vsel %vm93, %v43, 0
    %v125 = vsel %vm93, %v44, 0
    %v128 = vsel %vm93, %v45, 0
    %v131 = vsel %vm93, %v46, 0
    %v134 = vsel %vm93, %v47, 0
    %v137 = vsel %vm93, %v48, 0
    %v140 = vsel %vm93, %v49, 0
    %v143 = vsel %vm93, %v50, 0
    %v146 = vsel %vm93, %v51, 0
    %v149 = vsel %vm93, %v52, 0
    %v152 = vsel %vm93, %v53, 0
    %v155 = vsel %vm93, %v54, 0
    %v158 = vsel %vm93, %v55, 0
    %v161 = vsel %vm93, %v56, 0
    %v164 = vsel %vm93, %v57, 0
    %v167 = vsel %vm93, %v58, 0
    %v170 = vsel %vm93, %v59, 0
    %v173 = vsel %vm93, %v60, 0
    %v176 = vsel %vm93, %v61, 0
    %v179 = vsel %vm93, %v62, 0
    %v182 = vsel %vm93, %v63, 0
    %v185 = vsel %vm93, %v64, 0
    %v188 = vsel %vm93, %v65, 0
    %v191 = vsel %vm93, %v66, 0
    %v194 = vsel %vm93, %v67, 0
    %v197 = vsel %vm93, %v68, 0
    %v200 = vsel %vm93, %v69, 0
    %v203 = vsel %vm93, %v70, 0
    %v206 = vsel %vm93, %v71, 0
    %208 = vmatprep.subr.mxu0 0.0
    %209 = vmatpush1.msra.mxu0 %v72
    %210 = vmatprep.subr.mxu0 0.0
    %211 = vmatpush1.msra.mxu0 %v73
    %212 = vmatprep.subr.mxu0 0.0
    %213 = vmatpush1.msra.mxu0 0.0
    %214 = vmatprep.subr.mxu0 0.0
    %215 = vmatpush1.msra.mxu0 0.0
    %216 = vmatprep.subr.mxu0 0.0
    %217 = vmatpush1.msra.mxu0 0.0
    %218 = vmatprep.subr.mxu0 0.0
    %219 = vmatpush1.msra.mxu0 0.0
    %220 = vmatprep.subr.mxu0 0.0
    %221 = vmatpush1.msra.mxu0 0.0
    %222 = vmatprep.subr.mxu0 0.0
    %223 = vmatpush1.msra.mxu0 0.0
    %224 = vmatprep.subr.mxu0 0.0
    %225 = vmatpush1.msra.mxu0 0.0
    %226 = vmatprep.subr.mxu0 0.0
    %227 = vmatpush1.msra.mxu0 0.0
    %228 = vmatprep.subr.mxu0 0.0
    %229 = vmatpush1.msra.mxu0 0.0
    %230 = vmatprep.subr.mxu0 0.0
    %231 = vmatpush1.msra.mxu0 0.0
    %232 = vmatprep.subr.mxu0 0.0
    %233 = vmatpush1.msra.mxu0 0.0
    %234 = vmatprep.subr.mxu0 0.0
    %235 = vmatpush1.msra.mxu0 0.0
    %236 = vmatprep.subr.mxu0 0.0
    %237 = vmatpush1.msra.mxu0 0.0
    %238 = vmatprep.subr.mxu0 0.0
    %239 = vmatpush1.msra.mxu0 0.0
    %240 = vmatprep.subr.mxu0 0.0
    %241 = vmatpush1.msra.mxu0 0.0
    %242 = vmatprep.subr.mxu0 0.0
    %243 = vmatpush1.msra.mxu0 0.0
    %244 = vmatprep.subr.mxu0 0.0
    %245 = vmatpush1.msra.mxu0 0.0
    %246 = vmatprep.subr.mxu0 0.0
    %247 = vmatpush1.msra.mxu0 0.0
    %248 = vmatprep.subr.mxu0 0.0
    %249 = vmatpush1.msra.mxu0 0.0
    %250 = vmatprep.subr.mxu0 0.0
    %251 = vmatpush1.msra.mxu0 0.0
    %252 = vmatprep.subr.mxu0 0.0
    %253 = vmatpush1.msra.mxu0 0.0
    %254 = vmatprep.subr.mxu0 0.0
    %255 = vmatpush1.msra.mxu0 0.0
    %256 = vmatprep.subr.mxu0 0.0
    %257 = vmatpush1.msra.mxu0 0.0
    %258 = vmatprep.subr.mxu0 0.0
    %259 = vmatpush1.msra.mxu0 0.0
    %260 = vmatprep.subr.mxu0 0.0
    %261 = vmatpush1.msra.mxu0 0.0
    %262 = vmatprep.subr.mxu0 0.0
    %263 = vmatpush1.msra.mxu0 0.0
    %264 = vmatprep.subr.mxu0 0.0
    %265 = vmatpush1.msra.mxu0 0.0
    %266 = vmatprep.subr.mxu0 0.0
    %267 = vmatpush1.msra.mxu0 0.0
    %268 = vmatprep.subr.mxu0 0.0
    %269 = vmatpush1.msra.mxu0 0.0
    %270 = vmatprep.subr.mxu0 0.0
    %271 = vmatpush1.msra.mxu0 0.0
    %272 = vmatprep.mubr.f32.mxu0 0.0
    %273 = vmatmul.mubr.f32.gmra.mrb[0].mxu0 %v95
    %v274 = vpop.f32.mrb[0].mxu0
    %v275 = vadd.f32 %v91, %v274
    %v276 = vpop.f32.mrb[0].mxu0
    %277 = vmatprep.mubr.f32.mxu0 0.0
    %278 = vmatmul.mubr.f32.gmra.mrb[0].mxu0 %v98
    %v279 = vpop.f32.mrb[0].mxu0
    %v280 = vadd.f32 %v91, %v279
    %v281 = vpop.f32.mrb[0].mxu0
    %282 = vmatprep.mubr.f32.mxu0 0.0
    %283 = vmatmul.mubr.f32.gmra.mrb[0].mxu0 %v101
    %v284 = vpop.f32.mrb[0].mxu0
    %v285 = vadd.f32 %v91, %v284
    %v286 = vpop.f32.mrb[0].mxu0
    %287 = vmatprep.mubr.f32.mxu0 0.0
    %288 = vmatmul.mubr.f32.gmra.mrb[0].mxu0 %v104
    %v289 = vpop.f32.mrb[0].mxu0
    %v290 = vadd.f32 %v91, %v289
    %v291 = vpop.f32.mrb[0].mxu0
    %292 = vmatprep.mubr.f32.mxu0 0.0
    %293 = vmatmul.mubr.f32.gmra.mrb[0].mxu0 %v107
    %v294 = vpop.f32.mrb[0].mxu0
    %v295 = vadd.f32 %v91, %v294
    %v296 = vpop.f32.mrb[0].mxu0
    %297 = vmatprep.mubr.f32.mxu0 0.0
    %298 = vmatmul.mubr.f32.gmra.mrb[0].mxu0 %v110
    %v299 = vpop.f32.mrb[0].mxu0
    %v300 = vadd.f32 %v91, %v299
    %v301 = vpop.f32.mrb[0].mxu0
    %302 = vmatprep.mubr.f32.mxu0 0.0
    %303 = vmatmul.mubr.f32.gmra.mrb[0].mxu0 %v113
    %v304 = vpop.f32.mrb[0].mxu0
    %v305 = vadd.f32 %v91, %v304
    %v306 = vpop.f32.mrb[0].mxu0
    %307 = vmatprep.mubr.f32.mxu0 0.0
    %308 = vmatmul.mubr.f32.gmra.mrb[0].mxu0 %v116
    %v309 = vpop.f32.mrb[0].mxu0
    %v310 = vadd.f32 %v91, %v309
    %v311 = vpop.f32.mrb[0].mxu0
    %312 = vmatprep.mubr.f32.mxu0 0.0
    %313 = vmatmul.mubr.f32.gmra.mrb[0].mxu0 %v119
    %v314 = vpop.f32.mrb[0].mxu0
    %v315 = vadd.f32 %v91, %v314
    %v316 = vpop.f32.mrb[0].mxu0
    %317 = vmatprep.mubr.f32.mxu0 0.0
    %318 = vmatmul.mubr.f32.gmra.mrb[0].mxu0 %v122
    %v319 = vpop.f32.mrb[0].mxu0
    %v320 = vadd.f32 %v91, %v319
    %v321 = vpop.f32.mrb[0].mxu0
    %322 = vmatprep.mubr.f32.mxu0 0.0
    %323 = vmatmul.mubr.f32.gmra.mrb[0].mxu0 %v125
    %v324 = vpop.f32.mrb[0].mxu0
    %v325 = vadd.f32 %v91, %v324
    %v326 = vpop.f32.mrb[0].mxu0
    %327 = vmatprep.mubr.f32.mxu0 0.0
    %328 = vmatmul.mubr.f32.gmra.mrb[0].mxu0 %v128
    %v329 = vpop.f32.mrb[0].mxu0
    %v330 = vadd.f32 %v91, %v329
    %v331 = vpop.f32.mrb[0].mxu0
    %332 = vmatprep.mubr.f32.mxu0 0.0
    %333 = vmatmul.mubr.f32.gmra.mrb[0].mxu0 %v131
    %v334 = vpop.f32.mrb[0].mxu0
    %v335 = vadd.f32 %v91, %v334
    %v336 = vpop.f32.mrb[0].mxu0
    %337 = vmatprep.mubr.f32.mxu0 0.0
    %338 = vmatmul.mubr.f32.gmra.mrb[0].mxu0 %v134
    %v339 = vpop.f32.mrb[0].mxu0
    %v340 = vadd.f32 %v91, %v339
    %v341 = vpop.f32.mrb[0].mxu0
    %342 = vmatprep.mubr.f32.mxu0 0.0
    %343 = vmatmul.mubr.f32.gmra.mrb[0].mxu0 %v137
    %v344 = vpop.f32.mrb[0].mxu0
    %v345 = vadd.f32 %v91, %v344
    %v346 = vpop.f32.mrb[0].mxu0
    %347 = vmatprep.mubr.f32.mxu0 0.0
    %348 = vmatmul.mubr.f32.gmra.mrb[0].mxu0 %v140
    %v349 = vpop.f32.mrb[0].mxu0
    %v350 = vadd.f32 %v91, %v349
    %v351 = vpop.f32.mrb[0].mxu0
    %352 = vmatprep.mubr.f32.mxu0 0.0
    %353 = vmatmul.mubr.f32.gmra.mrb[0].mxu0 %v143
    %v354 = vpop.f32.mrb[0].mxu0
    %v355 = vadd.f32 %v91, %v354
    %v356 = vpop.f32.mrb[0].mxu0
    %357 = vmatprep.mubr.f32.mxu0 0.0
    %358 = vmatmul.mubr.f32.gmra.mrb[0].mxu0 %v146
    %v359 = vpop.f32.mrb[0].mxu0
    %v360 = vadd.f32 %v91, %v359
    %v361 = vpop.f32.mrb[0].mxu0
    %362 = vmatprep.mubr.f32.mxu0 0.0
    %363 = vmatmul.mubr.f32.gmra.mrb[0].mxu0 %v149
    %v364 = vpop.f32.mrb[0].mxu0
    %v365 = vadd.f32 %v91, %v364
    %v366 = vpop.f32.mrb[0].mxu0
    %367 = vmatprep.mubr.f32.mxu0 0.0
    %368 = vmatmul.mubr.f32.gmra.mrb[0].mxu0 %v152
    %v369 = vpop.f32.mrb[0].mxu0
    %v370 = vadd.f32 %v91, %v369
    %v371 = vpop.f32.mrb[0].mxu0
    %372 = vmatprep.mubr.f32.mxu0 0.0
    %373 = vmatmul.mubr.f32.gmra.mrb[0].mxu0 %v155
    %v374 = vpop.f32.mrb[0].mxu0
    %v375 = vadd.f32 %v91, %v374
    %v376 = vpop.f32.mrb[0].mxu0
    %377 = vmatprep.mubr.f32.mxu0 0.0
    %378 = vmatmul.mubr.f32.gmra.mrb[0].mxu0 %v158
    %v379 = vpop.f32.mrb[0].mxu0
    %v380 = vadd.f32 %v91, %v379
    %v381 = vpop.f32.mrb[0].mxu0
    %382 = vmatprep.mubr.f32.mxu0 0.0
    %383 = vmatmul.mubr.f32.gmra.mrb[0].mxu0 %v161
    %v384 = vpop.f32.mrb[0].mxu0
    %v385 = vadd.f32 %v91, %v384
    %v386 = vpop.f32.mrb[0].mxu0
    %387 = vmatprep.mubr.f32.mxu0 0.0
    %388 = vmatmul.mubr.f32.gmra.mrb[0].mxu0 %v164
    %v389 = vpop.f32.mrb[0].mxu0
    %v390 = vadd.f32 %v91, %v389
    %v391 = vpop.f32.mrb[0].mxu0
    %392 = vmatprep.mubr.f32.mxu0 0.0
    %393 = vmatmul.mubr.f32.gmra.mrb[0].mxu0 %v167
    %v394 = vpop.f32.mrb[0].mxu0
    %v395 = vadd.f32 %v91, %v394
    %v396 = vpop.f32.mrb[0].mxu0
    %397 = vmatprep.mubr.f32.mxu0 0.0
    %398 = vmatmul.mubr.f32.gmra.mrb[0].mxu0 %v170
    %v399 = vpop.f32.mrb[0].mxu0
    %v400 = vadd.f32 %v91, %v399
    %v401 = vpop.f32.mrb[0].mxu0
    %402 = vmatprep.mubr.f32.mxu0 0.0
    %403 = vmatmul.mubr.f32.gmra.mrb[0].mxu0 %v173
    %v404 = vpop.f32.mrb[0].mxu0
    %v405 = vadd.f32 %v91, %v404
    %v406 = vpop.f32.mrb[0].mxu0
    %407 = vmatprep.mubr.f32.mxu0 0.0
    %408 = vmatmul.mubr.f32.gmra.mrb[0].mxu0 %v176
    %v409 = vpop.f32.mrb[0].mxu0
    %v410 = vadd.f32 %v91, %v409
    %v411 = vpop.f32.mrb[0].mxu0
    %412 = vmatprep.mubr.f32.mxu0 0.0
    %413 = vmatmul.mubr.f32.gmra.mrb[0].mxu0 %v179
    %v414 = vpop.f32.mrb[0].mxu0
    %v415 = vadd.f32 %v91, %v414
    %v416 = vpop.f32.mrb[0].mxu0
    %417 = vmatprep.mubr.f32.mxu0 0.0
    %418 = vmatmul.mubr.f32.gmra.mrb[0].mxu0 %v182
    %v419 = vpop.f32.mrb[0].mxu0
    %v420 = vadd.f32 %v91, %v419
    %v421 = vpop.f32.mrb[0].mxu0
    %422 = vmatprep.mubr.f32.mxu0 0.0
    %423 = vmatmul.mubr.f32.gmra.mrb[0].mxu0 %v185
    %v424 = vpop.f32.mrb[0].mxu0
    %v425 = vadd.f32 %v91, %v424
    %v426 = vpop.f32.mrb[0].mxu0
    %427 = vmatprep.mubr.f32.mxu0 0.0
    %428 = vmatmul.mubr.f32.gmra.mrb[0].mxu0 %v188
    %v429 = vpop.f32.mrb[0].mxu0
    %v430 = vadd.f32 %v91, %v429
    %v431 = vpop.f32.mrb[0].mxu0
    %432 = vmatprep.mubr.f32.mxu0 0.0
    %433 = vmatmul.mubr.f32.gmra.mrb[0].mxu0 %v191
    %v434 = vpop.f32.mrb[0].mxu0
    %v435 = vadd.f32 %v91, %v434
    %v436 = vpop.f32.mrb[0].mxu0
    %437 = vmatprep.mubr.f32.mxu0 0.0
    %438 = vmatmul.mubr.f32.gmra.mrb[0].mxu0 %v194
    %v439 = vpop.f32.mrb[0].mxu0
    %v440 = vadd.f32 %v91, %v439
    %v441 = vpop.f32.mrb[0].mxu0
    %442 = vmatprep.mubr.f32.mxu0 0.0
    %443 = vmatmul.mubr.f32.gmra.mrb[0].mxu0 %v197
    %v444 = vpop.f32.mrb[0].mxu0
    %v445 = vadd.f32 %v91, %v444
    %v446 = vpop.f32.mrb[0].mxu0
    %447 = vmatprep.mubr.f32.mxu0 0.0
    %448 = vmatmul.mubr.f32.gmra.mrb[0].mxu0 %v200
    %v449 = vpop.f32.mrb[0].mxu0
    %v450 = vadd.f32 %v91, %v449
    %v451 = vpop.f32.mrb[0].mxu0
    %452 = vmatprep.mubr.f32.mxu0 0.0
    %453 = vmatmul.mubr.f32.gmra.mrb[0].mxu0 %v203
    %v454 = vpop.f32.mrb[0].mxu0
    %v455 = vadd.f32 %v91, %v454
    %v456 = vpop.f32.mrb[0].mxu0
    %457 = vmatprep.mubr.f32.mxu0 0.0
    %458 = vmatmul.mubr.f32.gmra.mrb[0].mxu0 %v206
    %v459 = vpop.f32.mrb[0].mxu0
    %v460 = vadd.f32 %v91, %v459
    %v461 = vpop.f32.mrb[0].mxu0
    %462 = vdwg.mxu0
    %v463 = vmul.f32 %v275, 0.01
    %v464 = vmul.f32 %v280, 0.01
    %v465 = vmul.f32 %v285, 0.01
    %v466 = vmul.f32 %v290, 0.01
    %v467 = vmul.f32 %v295, 0.01
    %v468 = vmul.f32 %v300, 0.01
    %v469 = vmul.f32 %v305, 0.01
    %v470 = vmul.f32 %v310, 0.01
    %v471 = vmul.f32 %v315, 0.01
    %v472 = vmul.f32 %v320, 0.01
    %v473 = vmul.f32 %v325, 0.01
    %v474 = vmul.f32 %v330, 0.01
    %v475 = vmul.f32 %v335, 0.01
    %v476 = vmul.f32 %v340, 0.01
    %v477 = vmul.f32 %v345, 0.01
    %v478 = vmul.f32 %v350, 0.01
    %v479 = vmul.f32 %v355, 0.01
    %v480 = vmul.f32 %v360, 0.01
    %v481 = vmul.f32 %v365, 0.01
    %v482 = vmul.f32 %v370, 0.01
    %v483 = vmul.f32 %v375, 0.01
    %v484 = vmul.f32 %v380, 0.01
    %v485 = vmul.f32 %v385, 0.01
    %v486 = vmul.f32 %v390, 0.01
    %v487 = vmul.f32 %v395, 0.01
    %v488 = vmul.f32 %v400, 0.01
    %v489 = vmul.f32 %v405, 0.01
    %v490 = vmul.f32 %v410, 0.01
    %v491 = vmul.f32 %v415, 0.01
    %v492 = vmul.f32 %v420, 0.01
    %v493 = vmul.f32 %v425, 0.01
    %v494 = vmul.f32 %v430, 0.01
    %v495 = vmul.f32 %v435, 0.01
    %v496 = vmul.f32 %v440, 0.01
    %v497 = vmul.f32 %v445, 0.01
    %v498 = vmul.f32 %v450, 0.01
    %v499 = vmul.f32 %v455, 0.01
    %v500 = vmul.f32 %v460, 0.01
    %v501 = vmax.f32 %v275, %v463
    %v502 = vmax.f32 %v280, %v464
    %v503 = vmax.f32 %v285, %v465
    %v504 = vmax.f32 %v290, %v466
    %v505 = vmax.f32 %v295, %v467
    %v506 = vmax.f32 %v300, %v468
    %v507 = vmax.f32 %v305, %v469
    %v508 = vmax.f32 %v310, %v470
    %v509 = vmax.f32 %v315, %v471
    %v510 = vmax.f32 %v320, %v472
    %v511 = vmax.f32 %v325, %v473
    %v512 = vmax.f32 %v330, %v474
    %v513 = vmax.f32 %v335, %v475
    %v514 = vmax.f32 %v340, %v476
    %v515 = vmax.f32 %v345, %v477
    %v516 = vmax.f32 %v350, %v478
    %v517 = vmax.f32 %v355, %v479
    %v518 = vmax.f32 %v360, %v480
    %v519 = vmax.f32 %v365, %v481
    %v520 = vmax.f32 %v370, %v482
    %v521 = vmax.f32 %v375, %v483
    %v522 = vmax.f32 %v380, %v484
    %v523 = vmax.f32 %v385, %v485
    %v524 = vmax.f32 %v390, %v486
    %v525 = vmax.f32 %v395, %v487
    %v526 = vmax.f32 %v400, %v488
    %v527 = vmax.f32 %v405, %v489
    %v528 = vmax.f32 %v410, %v490
    %v529 = vmax.f32 %v415, %v491
    %v530 = vmax.f32 %v420, %v492
    %v531 = vmax.f32 %v425, %v493
    %v532 = vmax.f32 %v430, %v494
    %v533 = vmax.f32 %v435, %v495
    %v534 = vmax.f32 %v440, %v496
    %v535 = vmax.f32 %v445, %v497
    %v536 = vmax.f32 %v450, %v498
    %v537 = vmax.f32 %v455, %v499
    %v538 = vmax.f32 %v460, %v500
    %v540 = vlaneseq
    %v541 = vshrl.u32 %v540, 7
    %v542 = vsub.s32 0, %v541
    %v543 = vrot.slane %v80, %v542
    %vm545 = vcmask 326656
    %v547 = vsel %vm545, %v501, 0
    %v550 = vsel %vm545, %v502, 0
    %v553 = vsel %vm545, %v503, 0
    %v556 = vsel %vm545, %v504, 0
    %v559 = vsel %vm545, %v505, 0
    %v562 = vsel %vm545, %v506, 0
    %v565 = vsel %vm545, %v507, 0
    %v568 = vsel %vm545, %v508, 0
    %v571 = vsel %vm545, %v509, 0
    %v574 = vsel %vm545, %v510, 0
    %v577 = vsel %vm545, %v511, 0
    %v580 = vsel %vm545, %v512, 0
    %v583 = vsel %vm545, %v513, 0
    %v586 = vsel %vm545, %v514, 0
    %v589 = vsel %vm545, %v515, 0
    %v592 = vsel %vm545, %v516, 0
    %v595 = vsel %vm545, %v517, 0
    %v598 = vsel %vm545, %v518, 0
    %v601 = vsel %vm545, %v519, 0
    %v604 = vsel %vm545, %v520, 0
    %v607 = vsel %vm545, %v521, 0
    %v610 = vsel %vm545, %v522, 0
    %v613 = vsel %vm545, %v523, 0
    %v616 = vsel %vm545, %v524, 0
    %v619 = vsel %vm545, %v525, 0
    %v622 = vsel %vm545, %v526, 0
    %v625 = vsel %vm545, %v527, 0
    %v628 = vsel %vm545, %v528, 0
    %v631 = vsel %vm545, %v529, 0
    %v634 = vsel %vm545, %v530, 0
    %v637 = vsel %vm545, %v531, 0
    %v640 = vsel %vm545, %v532, 0
    %v643 = vsel %vm545, %v533, 0
    %v646 = vsel %vm545, %v534, 0
    %v649 = vsel %vm545, %v535, 0
    %v652 = vsel %vm545, %v536, 0
    %v655 = vsel %vm545, %v537, 0
    %v658 = vsel %vm545, %v538, 0
    %660 = vmatprep.subr.mxu0 0.0
    %661 = vmatpush1.msra.mxu0 %v75
    %662 = vmatprep.subr.mxu0 0.0
    %663 = vmatpush1.msra.mxu0 %v76
    %664 = vmatprep.subr.mxu0 0.0
    %665 = vmatpush1.msra.mxu0 %v77
    %666 = vmatprep.subr.mxu0 0.0
    %667 = vmatpush1.msra.mxu0 %v78
    %668 = vmatprep.subr.mxu0 0.0
    %669 = vmatpush1.msra.mxu0 %v79
    %670 = vmatprep.subr.mxu0 0.0
    %671 = vmatpush1.msra.mxu0 0.0
    %672 = vmatprep.subr.mxu0 0.0
    %673 = vmatpush1.msra.mxu0 0.0
    %674 = vmatprep.subr.mxu0 0.0
    %675 = vmatpush1.msra.mxu0 0.0
    %676 = vmatprep.subr.mxu0 0.0
    %677 = vmatpush1.msra.mxu0 0.0
    %678 = vmatprep.subr.mxu0 0.0
    %679 = vmatpush1.msra.mxu0 0.0
    %680 = vmatprep.subr.mxu0 0.0
    %681 = vmatpush1.msra.mxu0 0.0
    %682 = vmatprep.subr.mxu0 0.0
    %683 = vmatpush1.msra.mxu0 0.0
    %684 = vmatprep.subr.mxu0 0.0
    %685 = vmatpush1.msra.mxu0 0.0
    %686 = vmatprep.subr.mxu0 0.0
    %687 = vmatpush1.msra.mxu0 0.0
    %688 = vmatprep.subr.mxu0 0.0
    %689 = vmatpush1.msra.mxu0 0.0
    %690 = vmatprep.subr.mxu0 0.0
    %691 = vmatpush1.msra.mxu0 0.0
    %692 = vmatprep.subr.mxu0 0.0
    %693 = vmatpush1.msra.mxu0 0.0
    %694 = vmatprep.subr.mxu0 0.0
    %695 = vmatpush1.msra.mxu0 0.0
    %696 = vmatprep.subr.mxu0 0.0
    %697 = vmatpush1.msra.mxu0 0.0
    %698 = vmatprep.subr.mxu0 0.0
    %699 = vmatpush1.msra.mxu0 0.0
    %700 = vmatprep.subr.mxu0 0.0
    %701 = vmatpush1.msra.mxu0 0.0
    %702 = vmatprep.subr.mxu0 0.0
    %703 = vmatpush1.msra.mxu0 0.0
    %704 = vmatprep.subr.mxu0 0.0
    %705 = vmatpush1.msra.mxu0 0.0
    %706 = vmatprep.subr.mxu0 0.0
    %707 = vmatpush1.msra.mxu0 0.0
    %708 = vmatprep.subr.mxu0 0.0
    %709 = vmatpush1.msra.mxu0 0.0
    %710 = vmatprep.subr.mxu0 0.0
    %711 = vmatpush1.msra.mxu0 0.0
    %712 = vmatprep.subr.mxu0 0.0
    %713 = vmatpush1.msra.mxu0 0.0
    %714 = vmatprep.subr.mxu0 0.0
    %715 = vmatpush1.msra.mxu0 0.0
    %716 = vmatprep.subr.mxu0 0.0
    %717 = vmatpush1.msra.mxu0 0.0
    %718 = vmatprep.subr.mxu0 0.0
    %719 = vmatpush1.msra.mxu0 0.0
    %720 = vmatprep.subr.mxu0 0.0
    %721 = vmatpush1.msra.mxu0 0.0
    %722 = vmatprep.subr.mxu0 0.0
    %723 = vmatpush1.msra.mxu0 0.0
    %724 = vmatprep.mubr.f32.mxu0 0.0
    %725 = vmatmul.mubr.f32.gmra.mrb[0].mxu0 %v547
    %v726 = vpop.f32.mrb[0].mxu0
    %v727 = vadd.f32 %v543, %v726
    %v728 = vpop.f32.mrb[0].mxu0
    %729 = vmatprep.mubr.f32.mxu0 0.0
    %730 = vmatmul.mubr.f32.gmra.mrb[0].mxu0 %v550
    %v731 = vpop.f32.mrb[0].mxu0
    %v732 = vadd.f32 %v543, %v731
    %v733 = vpop.f32.mrb[0].mxu0
    %734 = vmatprep.mubr.f32.mxu0 0.0
    %735 = vmatmul.mubr.f32.gmra.mrb[0].mxu0 %v553
    %v736 = vpop.f32.mrb[0].mxu0
    %v737 = vadd.f32 %v543, %v736
    %v738 = vpop.f32.mrb[0].mxu0
    %739 = vmatprep.mubr.f32.mxu0 0.0
    %740 = vmatmul.mubr.f32.gmra.mrb[0].mxu0 %v556
    %v741 = vpop.f32.mrb[0].mxu0
    %v742 = vadd.f32 %v543, %v741
    %v743 = vpop.f32.mrb[0].mxu0
    %744 = vmatprep.mubr.f32.mxu0 0.0
    %745 = vmatmul.mubr.f32.gmra.mrb[0].mxu0 %v559
    %v746 = vpop.f32.mrb[0].mxu0
    %v747 = vadd.f32 %v543, %v746
    %v748 = vpop.f32.mrb[0].mxu0
    %749 = vmatprep.mubr.f32.mxu0 0.0
    %750 = vmatmul.mubr.f32.gmra.mrb[0].mxu0 %v562
    %v751 = vpop.f32.mrb[0].mxu0
    %v752 = vadd.f32 %v543, %v751
    %v753 = vpop.f32.mrb[0].mxu0
    %754 = vmatprep.mubr.f32.mxu0 0.0
    %755 = vmatmul.mubr.f32.gmra.mrb[0].mxu0 %v565
    %v756 = vpop.f32.mrb[0].mxu0
    %v757 = vadd.f32 %v543, %v756
    %v758 = vpop.f32.mrb[0].mxu0
    %759 = vmatprep.mubr.f32.mxu0 0.0
    %760 = vmatmul.mubr.f32.gmra.mrb[0].mxu0 %v568
    %v761 = vpop.f32.mrb[0].mxu0
    %v762 = vadd.f32 %v543, %v761
    %v763 = vpop.f32.mrb[0].mxu0
    %764 = vmatprep.mubr.f32.mxu0 0.0
    %765 = vmatmul.mubr.f32.gmra.mrb[0].mxu0 %v571
    %v766 = vpop.f32.mrb[0].mxu0
    %v767 = vadd.f32 %v543, %v766
    %v768 = vpop.f32.mrb[0].mxu0
    %769 = vmatprep.mubr.f32.mxu0 0.0
    %770 = vmatmul.mubr.f32.gmra.mrb[0].mxu0 %v574
    %v771 = vpop.f32.mrb[0].mxu0
    %v772 = vadd.f32 %v543, %v771
    %v773 = vpop.f32.mrb[0].mxu0
    %774 = vmatprep.mubr.f32.mxu0 0.0
    %775 = vmatmul.mubr.f32.gmra.mrb[0].mxu0 %v577
    %v776 = vpop.f32.mrb[0].mxu0
    %v777 = vadd.f32 %v543, %v776
    %v778 = vpop.f32.mrb[0].mxu0
    %779 = vmatprep.mubr.f32.mxu0 0.0
    %780 = vmatmul.mubr.f32.gmra.mrb[0].mxu0 %v580
    %v781 = vpop.f32.mrb[0].mxu0
    %v782 = vadd.f32 %v543, %v781
    %v783 = vpop.f32.mrb[0].mxu0
    %784 = vmatprep.mubr.f32.mxu0 0.0
    %785 = vmatmul.mubr.f32.gmra.mrb[0].mxu0 %v583
    %v786 = vpop.f32.mrb[0].mxu0
    %v787 = vadd.f32 %v543, %v786
    %v788 = vpop.f32.mrb[0].mxu0
    %789 = vmatprep.mubr.f32.mxu0 0.0
    %790 = vmatmul.mubr.f32.gmra.mrb[0].mxu0 %v586
    %v791 = vpop.f32.mrb[0].mxu0
    %v792 = vadd.f32 %v543, %v791
    %v793 = vpop.f32.mrb[0].mxu0
    %794 = vmatprep.mubr.f32.mxu0 0.0
    %795 = vmatmul.mubr.f32.gmra.mrb[0].mxu0 %v589
    %v796 = vpop.f32.mrb[0].mxu0
    %v797 = vadd.f32 %v543, %v796
    %v798 = vpop.f32.mrb[0].mxu0
    %799 = vmatprep.mubr.f32.mxu0 0.0
    %800 = vmatmul.mubr.f32.gmra.mrb[0].mxu0 %v592
    %v801 = vpop.f32.mrb[0].mxu0
    %v802 = vadd.f32 %v543, %v801
    %v803 = vpop.f32.mrb[0].mxu0
    %804 = vmatprep.mubr.f32.mxu0 0.0
    %805 = vmatmul.mubr.f32.gmra.mrb[0].mxu0 %v595
    %v806 = vpop.f32.mrb[0].mxu0
    %v807 = vadd.f32 %v543, %v806
    %v808 = vpop.f32.mrb[0].mxu0
    %809 = vmatprep.mubr.f32.mxu0 0.0
    %810 = vmatmul.mubr.f32.gmra.mrb[0].mxu0 %v598
    %v811 = vpop.f32.mrb[0].mxu0
    %v812 = vadd.f32 %v543, %v811
    %v813 = vpop.f32.mrb[0].mxu0
    %814 = vmatprep.mubr.f32.mxu0 0.0
    %815 = vmatmul.mubr.f32.gmra.mrb[0].mxu0 %v601
    %v816 = vpop.f32.mrb[0].mxu0
    %v817 = vadd.f32 %v543, %v816
    %v818 = vpop.f32.mrb[0].mxu0
    %819 = vmatprep.mubr.f32.mxu0 0.0
    %820 = vmatmul.mubr.f32.gmra.mrb[0].mxu0 %v604
    %v821 = vpop.f32.mrb[0].mxu0
    %v822 = vadd.f32 %v543, %v821
    %v823 = vpop.f32.mrb[0].mxu0
    %824 = vmatprep.mubr.f32.mxu0 0.0
    %825 = vmatmul.mubr.f32.gmra.mrb[0].mxu0 %v607
    %v826 = vpop.f32.mrb[0].mxu0
    %v827 = vadd.f32 %v543, %v826
    %v828 = vpop.f32.mrb[0].mxu0
    %829 = vmatprep.mubr.f32.mxu0 0.0
    %830 = vmatmul.mubr.f32.gmra.mrb[0].mxu0 %v610
    %v831 = vpop.f32.mrb[0].mxu0
    %v832 = vadd.f32 %v543, %v831
    %v833 = vpop.f32.mrb[0].mxu0
    %834 = vmatprep.mubr.f32.mxu0 0.0
    %835 = vmatmul.mubr.f32.gmra.mrb[0].mxu0 %v613
    %v836 = vpop.f32.mrb[0].mxu0
    %v837 = vadd.f32 %v543, %v836
    %v838 = vpop.f32.mrb[0].mxu0
    %839 = vmatprep.mubr.f32.mxu0 0.0
    %840 = vmatmul.mubr.f32.gmra.mrb[0].mxu0 %v616
    %v841 = vpop.f32.mrb[0].mxu0
    %v842 = vadd.f32 %v543, %v841
    %v843 = vpop.f32.mrb[0].mxu0
    %844 = vmatprep.mubr.f32.mxu0 0.0
    %845 = vmatmul.mubr.f32.gmra.mrb[0].mxu0 %v619
    %v846 = vpop.f32.mrb[0].mxu0
    %v847 = vadd.f32 %v543, %v846
    %v848 = vpop.f32.mrb[0].mxu0
    %849 = vmatprep.mubr.f32.mxu0 0.0
    %850 = vmatmul.mubr.f32.gmra.mrb[0].mxu0 %v622
    %v851 = vpop.f32.mrb[0].mxu0
    %v852 = vadd.f32 %v543, %v851
    %v853 = vpop.f32.mrb[0].mxu0
    %854 = vmatprep.mubr.f32.mxu0 0.0
    %855 = vmatmul.mubr.f32.gmra.mrb[0].mxu0 %v625
    %v856 = vpop.f32.mrb[0].mxu0
    %v857 = vadd.f32 %v543, %v856
    %v858 = vpop.f32.mrb[0].mxu0
    %859 = vmatprep.mubr.f32.mxu0 0.0
    %860 = vmatmul.mubr.f32.gmra.mrb[0].mxu0 %v628
    %v861 = vpop.f32.mrb[0].mxu0
    %v862 = vadd.f32 %v543, %v861
    %v863 = vpop.f32.mrb[0].mxu0
    %864 = vmatprep.mubr.f32.mxu0 0.0
    %865 = vmatmul.mubr.f32.gmra.mrb[0].mxu0 %v631
    %v866 = vpop.f32.mrb[0].mxu0
    %v867 = vadd.f32 %v543, %v866
    %v868 = vpop.f32.mrb[0].mxu0
    %869 = vmatprep.mubr.f32.mxu0 0.0
    %870 = vmatmul.mubr.f32.gmra.mrb[0].mxu0 %v634
    %v871 = vpop.f32.mrb[0].mxu0
    %v872 = vadd.f32 %v543, %v871
    %v873 = vpop.f32.mrb[0].mxu0
    %874 = vmatprep.mubr.f32.mxu0 0.0
    %875 = vmatmul.mubr.f32.gmra.mrb[0].mxu0 %v637
    %v876 = vpop.f32.mrb[0].mxu0
    %v877 = vadd.f32 %v543, %v876
    %v878 = vpop.f32.mrb[0].mxu0
    %879 = vmatprep.mubr.f32.mxu0 0.0
    %880 = vmatmul.mubr.f32.gmra.mrb[0].mxu0 %v640
    %v881 = vpop.f32.mrb[0].mxu0
    %v882 = vadd.f32 %v543, %v881
    %v883 = vpop.f32.mrb[0].mxu0
    %884 = vmatprep.mubr.f32.mxu0 0.0
    %885 = vmatmul.mubr.f32.gmra.mrb[0].mxu0 %v643
    %v886 = vpop.f32.mrb[0].mxu0
    %v887 = vadd.f32 %v543, %v886
    %v888 = vpop.f32.mrb[0].mxu0
    %889 = vmatprep.mubr.f32.mxu0 0.0
    %890 = vmatmul.mubr.f32.gmra.mrb[0].mxu0 %v646
    %v891 = vpop.f32.mrb[0].mxu0
    %v892 = vadd.f32 %v543, %v891
    %v893 = vpop.f32.mrb[0].mxu0
    %894 = vmatprep.mubr.f32.mxu0 0.0
    %895 = vmatmul.mubr.f32.gmra.mrb[0].mxu0 %v649
    %v896 = vpop.f32.mrb[0].mxu0
    %v897 = vadd.f32 %v543, %v896
    %v898 = vpop.f32.mrb[0].mxu0
    %899 = vmatprep.mubr.f32.mxu0 0.0
    %900 = vmatmul.mubr.f32.gmra.mrb[0].mxu0 %v652
    %v901 = vpop.f32.mrb[0].mxu0
    %v902 = vadd.f32 %v543, %v901
    %v903 = vpop.f32.mrb[0].mxu0
    %904 = vmatprep.mubr.f32.mxu0 0.0
    %905 = vmatmul.mubr.f32.gmra.mrb[0].mxu0 %v655
    %v906 = vpop.f32.mrb[0].mxu0
    %v907 = vadd.f32 %v543, %v906
    %v908 = vpop.f32.mrb[0].mxu0
    %909 = vmatprep.mubr.f32.mxu0 0.0
    %910 = vmatmul.mubr.f32.gmra.mrb[0].mxu0 %v658
    %v911 = vpop.f32.mrb[0].mxu0
    %v912 = vadd.f32 %v543, %v911
    %v913 = vpop.f32.mrb[0].mxu0
    %914 = vdwg.mxu0
    %v915 = vmul.f32 %v727, 0.01
    %v916 = vmul.f32 %v732, 0.01
    %v917 = vmul.f32 %v737, 0.01
    %v918 = vmul.f32 %v742, 0.01
    %v919 = vmul.f32 %v747, 0.01
    %v920 = vmul.f32 %v752, 0.01
    %v921 = vmul.f32 %v757, 0.01
    %v922 = vmul.f32 %v762, 0.01
    %v923 = vmul.f32 %v767, 0.01
    %v924 = vmul.f32 %v772, 0.01
    %v925 = vmul.f32 %v777, 0.01
    %v926 = vmul.f32 %v782, 0.01
    %v927 = vmul.f32 %v787, 0.01
    %v928 = vmul.f32 %v792, 0.01
    %v929 = vmul.f32 %v797, 0.01
    %v930 = vmul.f32 %v802, 0.01
    %v931 = vmul.f32 %v807, 0.01
    %v932 = vmul.f32 %v812, 0.01
    %v933 = vmul.f32 %v817, 0.01
    %v934 = vmul.f32 %v822, 0.01
    %v935 = vmul.f32 %v827, 0.01
    %v936 = vmul.f32 %v832, 0.01
    %v937 = vmul.f32 %v837, 0.01
    %v938 = vmul.f32 %v842, 0.01
    %v939 = vmul.f32 %v847, 0.01
    %v940 = vmul.f32 %v852, 0.01
    %v941 = vmul.f32 %v857, 0.01
    %v942 = vmul.f32 %v862, 0.01
    %v943 = vmul.f32 %v867, 0.01
    %v944 = vmul.f32 %v872, 0.01
    %v945 = vmul.f32 %v877, 0.01
    %v946 = vmul.f32 %v882, 0.01
    %v947 = vmul.f32 %v887, 0.01
    %v948 = vmul.f32 %v892, 0.01
    %v949 = vmul.f32 %v897, 0.01
    %v950 = vmul.f32 %v902, 0.01
    %v951 = vmul.f32 %v907, 0.01
    %v952 = vmul.f32 %v912, 0.01
    %v953 = vmax.f32 %v727, %v915
    %v954 = vmax.f32 %v732, %v916
    %v955 = vmax.f32 %v737, %v917
    %v956 = vmax.f32 %v742, %v918
    %v957 = vmax.f32 %v747, %v919
    %v958 = vmax.f32 %v752, %v920
    %v959 = vmax.f32 %v757, %v921
    %v960 = vmax.f32 %v762, %v922
    %v961 = vmax.f32 %v767, %v923
    %v962 = vmax.f32 %v772, %v924
    %v963 = vmax.f32 %v777, %v925
    %v964 = vmax.f32 %v782, %v926
    %v965 = vmax.f32 %v787, %v927
    %v966 = vmax.f32 %v792, %v928
    %v967 = vmax.f32 %v797, %v929
    %v968 = vmax.f32 %v802, %v930
    %v969 = vmax.f32 %v807, %v931
    %v970 = vmax.f32 %v812, %v932
    %v971 = vmax.f32 %v817, %v933
    %v972 = vmax.f32 %v822, %v934
    %v973 = vmax.f32 %v827, %v935
    %v974 = vmax.f32 %v832, %v936
    %v975 = vmax.f32 %v837, %v937
    %v976 = vmax.f32 %v842, %v938
    %v977 = vmax.f32 %v847, %v939
    %v978 = vmax.f32 %v852, %v940
    %v979 = vmax.f32 %v857, %v941
    %v980 = vmax.f32 %v862, %v942
    %v981 = vmax.f32 %v867, %v943
    %v982 = vmax.f32 %v872, %v944
    %v983 = vmax.f32 %v877, %v945
    %v984 = vmax.f32 %v882, %v946
    %v985 = vmax.f32 %v887, %v947
    %v986 = vmax.f32 %v892, %v948
    %v987 = vmax.f32 %v897, %v949
    %v988 = vmax.f32 %v902, %v950
    %v989 = vmax.f32 %v907, %v951
    %v990 = vmax.f32 %v912, %v952
    %v992 = vlaneseq
    %v993 = vshrl.u32 %v992, 7
    %v994 = vsub.s32 0, %v993
    %v995 = vrot.slane %v84, %v994
    %vm997 = vcmask 162816
    %v999 = vsel %vm997, %v953, 0
    %v1002 = vsel %vm997, %v954, 0
    %v1005 = vsel %vm997, %v955, 0
    %v1008 = vsel %vm997, %v956, 0
    %v1011 = vsel %vm997, %v957, 0
    %v1014 = vsel %vm997, %v958, 0
    %v1017 = vsel %vm997, %v959, 0
    %v1020 = vsel %vm997, %v960, 0
    %v1023 = vsel %vm997, %v961, 0
    %v1026 = vsel %vm997, %v962, 0
    %v1029 = vsel %vm997, %v963, 0
    %v1032 = vsel %vm997, %v964, 0
    %v1035 = vsel %vm997, %v965, 0
    %v1038 = vsel %vm997, %v966, 0
    %v1041 = vsel %vm997, %v967, 0
    %v1044 = vsel %vm997, %v968, 0
    %v1047 = vsel %vm997, %v969, 0
    %v1050 = vsel %vm997, %v970, 0
    %v1053 = vsel %vm997, %v971, 0
    %v1056 = vsel %vm997, %v972, 0
    %v1059 = vsel %vm997, %v973, 0
    %v1062 = vsel %vm997, %v974, 0
    %v1065 = vsel %vm997, %v975, 0
    %v1068 = vsel %vm997, %v976, 0
    %v1071 = vsel %vm997, %v977, 0
    %v1074 = vsel %vm997, %v978, 0
    %v1077 = vsel %vm997, %v979, 0
    %v1080 = vsel %vm997, %v980, 0
    %v1083 = vsel %vm997, %v981, 0
    %v1086 = vsel %vm997, %v982, 0
    %v1089 = vsel %vm997, %v983, 0
    %v1092 = vsel %vm997, %v984, 0
    %v1095 = vsel %vm997, %v985, 0
    %v1098 = vsel %vm997, %v986, 0
    %v1101 = vsel %vm997, %v987, 0
    %v1104 = vsel %vm997, %v988, 0
    %v1107 = vsel %vm997, %v989, 0
    %v1110 = vsel %vm997, %v990, 0
    %vm1112 = vcmask 1043456
    %v1114 = vsel %vm1112, %v83, 0
    %1116 = vmatprep.subr.mxu0 0.0
    %1117 = vmatpush1.msra.mxu0 %v81
    %1118 = vmatprep.subr.mxu0 0.0
    %1119 = vmatpush1.msra.mxu0 %v82
    %1120 = vmatprep.subr.mxu0 0.0
    %1121 = vmatpush1.msra.mxu0 %v1114
    %1122 = vmatprep.subr.mxu0 0.0
    %1123 = vmatpush1.msra.mxu0 0.0
    %1124 = vmatprep.subr.mxu0 0.0
    %1125 = vmatpush1.msra.mxu0 0.0
    %1126 = vmatprep.subr.mxu0 0.0
    %1127 = vmatpush1.msra.mxu0 0.0
    %1128 = vmatprep.subr.mxu0 0.0
    %1129 = vmatpush1.msra.mxu0 0.0
    %1130 = vmatprep.subr.mxu0 0.0
    %1131 = vmatpush1.msra.mxu0 0.0
    %1132 = vmatprep.subr.mxu0 0.0
    %1133 = vmatpush1.msra.mxu0 0.0
    %1134 = vmatprep.subr.mxu0 0.0
    %1135 = vmatpush1.msra.mxu0 0.0
    %1136 = vmatprep.subr.mxu0 0.0
    %1137 = vmatpush1.msra.mxu0 0.0
    %1138 = vmatprep.subr.mxu0 0.0
    %1139 = vmatpush1.msra.mxu0 0.0
    %1140 = vmatprep.subr.mxu0 0.0
    %1141 = vmatpush1.msra.mxu0 0.0
    %1142 = vmatprep.subr.mxu0 0.0
    %1143 = vmatpush1.msra.mxu0 0.0
    %1144 = vmatprep.subr.mxu0 0.0
    %1145 = vmatpush1.msra.mxu0 0.0
    %1146 = vmatprep.subr.mxu0 0.0
    %1147 = vmatpush1.msra.mxu0 0.0
    %1148 = vmatprep.subr.mxu0 0.0
    %1149 = vmatpush1.msra.mxu0 0.0
    %1150 = vmatprep.subr.mxu0 0.0
    %1151 = vmatpush1.msra.mxu0 0.0
    %1152 = vmatprep.subr.mxu0 0.0
    %1153 = vmatpush1.msra.mxu0 0.0
    %1154 = vmatprep.subr.mxu0 0.0
    %1155 = vmatpush1.msra.mxu0 0.0
    %1156 = vmatprep.subr.mxu0 0.0
    %1157 = vmatpush1.msra.mxu0 0.0
    %1158 = vmatprep.subr.mxu0 0.0
    %1159 = vmatpush1.msra.mxu0 0.0
    %1160 = vmatprep.subr.mxu0 0.0
    %1161 = vmatpush1.msra.mxu0 0.0
    %1162 = vmatprep.subr.mxu0 0.0
    %1163 = vmatpush1.msra.mxu0 0.0
    %1164 = vmatprep.subr.mxu0 0.0
    %1165 = vmatpush1.msra.mxu0 0.0
    %1166 = vmatprep.subr.mxu0 0.0
    %1167 = vmatpush1.msra.mxu0 0.0
    %1168 = vmatprep.subr.mxu0 0.0
    %1169 = vmatpush1.msra.mxu0 0.0
    %1170 = vmatprep.subr.mxu0 0.0
    %1171 = vmatpush1.msra.mxu0 0.0
    %1172 = vmatprep.subr.mxu0 0.0
    %1173 = vmatpush1.msra.mxu0 0.0
    %1174 = vmatprep.subr.mxu0 0.0
    %1175 = vmatpush1.msra.mxu0 0.0
    %1176 = vmatprep.subr.mxu0 0.0
    %1177 = vmatpush1.msra.mxu0 0.0
    %1178 = vmatprep.subr.mxu0 0.0
    %1179 = vmatpush1.msra.mxu0 0.0
    %1180 = vmatprep.mubr.f32.mxu0 0.0
    %1181 = vmatmul.mubr.f32.gmra.mrb[0].mxu0 %v999
    %v1182 = vpop.f32.mrb[0].mxu0
    %v1183 = vadd.f32 %v995, %v1182
    %v1184 = vpop.f32.mrb[0].mxu0
    %1185 = vmatprep.mubr.f32.mxu0 0.0
    %1186 = vmatmul.mubr.f32.gmra.mrb[0].mxu0 %v1002
    %v1187 = vpop.f32.mrb[0].mxu0
    %v1188 = vadd.f32 %v995, %v1187
    %v1189 = vpop.f32.mrb[0].mxu0
    %1190 = vmatprep.mubr.f32.mxu0 0.0
    %1191 = vmatmul.mubr.f32.gmra.mrb[0].mxu0 %v1005
    %v1192 = vpop.f32.mrb[0].mxu0
    %v1193 = vadd.f32 %v995, %v1192
    %v1194 = vpop.f32.mrb[0].mxu0
    %1195 = vmatprep.mubr.f32.mxu0 0.0
    %1196 = vmatmul.mubr.f32.gmra.mrb[0].mxu0 %v1008
    %v1197 = vpop.f32.mrb[0].mxu0
    %v1198 = vadd.f32 %v995, %v1197
    %v1199 = vpop.f32.mrb[0].mxu0
    %1200 = vmatprep.mubr.f32.mxu0 0.0
    %1201 = vmatmul.mubr.f32.gmra.mrb[0].mxu0 %v1011
    %v1202 = vpop.f32.mrb[0].mxu0
    %v1203 = vadd.f32 %v995, %v1202
    %v1204 = vpop.f32.mrb[0].mxu0
    %1205 = vmatprep.mubr.f32.mxu0 0.0
    %1206 = vmatmul.mubr.f32.gmra.mrb[0].mxu0 %v1014
    %v1207 = vpop.f32.mrb[0].mxu0
    %v1208 = vadd.f32 %v995, %v1207
    %v1209 = vpop.f32.mrb[0].mxu0
    %1210 = vmatprep.mubr.f32.mxu0 0.0
    %1211 = vmatmul.mubr.f32.gmra.mrb[0].mxu0 %v1017
    %v1212 = vpop.f32.mrb[0].mxu0
    %v1213 = vadd.f32 %v995, %v1212
    %v1214 = vpop.f32.mrb[0].mxu0
    %1215 = vmatprep.mubr.f32.mxu0 0.0
    %1216 = vmatmul.mubr.f32.gmra.mrb[0].mxu0 %v1020
    %v1217 = vpop.f32.mrb[0].mxu0
    %v1218 = vadd.f32 %v995, %v1217
    %v1219 = vpop.f32.mrb[0].mxu0
    %1220 = vmatprep.mubr.f32.mxu0 0.0
    %1221 = vmatmul.mubr.f32.gmra.mrb[0].mxu0 %v1023
    %v1222 = vpop.f32.mrb[0].mxu0
    %v1223 = vadd.f32 %v995, %v1222
    %v1224 = vpop.f32.mrb[0].mxu0
    %1225 = vmatprep.mubr.f32.mxu0 0.0
    %1226 = vmatmul.mubr.f32.gmra.mrb[0].mxu0 %v1026
    %v1227 = vpop.f32.mrb[0].mxu0
    %v1228 = vadd.f32 %v995, %v1227
    %v1229 = vpop.f32.mrb[0].mxu0
    %1230 = vmatprep.mubr.f32.mxu0 0.0
    %1231 = vmatmul.mubr.f32.gmra.mrb[0].mxu0 %v1029
    %v1232 = vpop.f32.mrb[0].mxu0
    %v1233 = vadd.f32 %v995, %v1232
    %v1234 = vpop.f32.mrb[0].mxu0
    %1235 = vmatprep.mubr.f32.mxu0 0.0
    %1236 = vmatmul.mubr.f32.gmra.mrb[0].mxu0 %v1032
    %v1237 = vpop.f32.mrb[0].mxu0
    %v1238 = vadd.f32 %v995, %v1237
    %v1239 = vpop.f32.mrb[0].mxu0
    %1240 = vmatprep.mubr.f32.mxu0 0.0
    %1241 = vmatmul.mubr.f32.gmra.mrb[0].mxu0 %v1035
    %v1242 = vpop.f32.mrb[0].mxu0
    %v1243 = vadd.f32 %v995, %v1242
    %v1244 = vpop.f32.mrb[0].mxu0
    %1245 = vmatprep.mubr.f32.mxu0 0.0
    %1246 = vmatmul.mubr.f32.gmra.mrb[0].mxu0 %v1038
    %v1247 = vpop.f32.mrb[0].mxu0
    %v1248 = vadd.f32 %v995, %v1247
    %v1249 = vpop.f32.mrb[0].mxu0
    %1250 = vmatprep.mubr.f32.mxu0 0.0
    %1251 = vmatmul.mubr.f32.gmra.mrb[0].mxu0 %v1041
    %v1252 = vpop.f32.mrb[0].mxu0
    %v1253 = vadd.f32 %v995, %v1252
    %v1254 = vpop.f32.mrb[0].mxu0
    %1255 = vmatprep.mubr.f32.mxu0 0.0
    %1256 = vmatmul.mubr.f32.gmra.mrb[0].mxu0 %v1044
    %v1257 = vpop.f32.mrb[0].mxu0
    %v1258 = vadd.f32 %v995, %v1257
    %v1259 = vpop.f32.mrb[0].mxu0
    %1260 = vmatprep.mubr.f32.mxu0 0.0
    %1261 = vmatmul.mubr.f32.gmra.mrb[0].mxu0 %v1047
    %v1262 = vpop.f32.mrb[0].mxu0
    %v1263 = vadd.f32 %v995, %v1262
    %v1264 = vpop.f32.mrb[0].mxu0
    %1265 = vmatprep.mubr.f32.mxu0 0.0
    %1266 = vmatmul.mubr.f32.gmra.mrb[0].mxu0 %v1050
    %v1267 = vpop.f32.mrb[0].mxu0
    %v1268 = vadd.f32 %v995, %v1267
    %v1269 = vpop.f32.mrb[0].mxu0
    %1270 = vmatprep.mubr.f32.mxu0 0.0
    %1271 = vmatmul.mubr.f32.gmra.mrb[0].mxu0 %v1053
    %v1272 = vpop.f32.mrb[0].mxu0
    %v1273 = vadd.f32 %v995, %v1272
    %v1274 = vpop.f32.mrb[0].mxu0
    %1275 = vmatprep.mubr.f32.mxu0 0.0
    %1276 = vmatmul.mubr.f32.gmra.mrb[0].mxu0 %v1056
    %v1277 = vpop.f32.mrb[0].mxu0
    %v1278 = vadd.f32 %v995, %v1277
    %v1279 = vpop.f32.mrb[0].mxu0
    %1280 = vmatprep.mubr.f32.mxu0 0.0
    %1281 = vmatmul.mubr.f32.gmra.mrb[0].mxu0 %v1059
    %v1282 = vpop.f32.mrb[0].mxu0
    %v1283 = vadd.f32 %v995, %v1282
    %v1284 = vpop.f32.mrb[0].mxu0
    %1285 = vmatprep.mubr.f32.mxu0 0.0
    %1286 = vmatmul.mubr.f32.gmra.mrb[0].mxu0 %v1062
    %v1287 = vpop.f32.mrb[0].mxu0
    %v1288 = vadd.f32 %v995, %v1287
    %v1289 = vpop.f32.mrb[0].mxu0
    %1290 = vmatprep.mubr.f32.mxu0 0.0
    %1291 = vmatmul.mubr.f32.gmra.mrb[0].mxu0 %v1065
    %v1292 = vpop.f32.mrb[0].mxu0
    %v1293 = vadd.f32 %v995, %v1292
    %v1294 = vpop.f32.mrb[0].mxu0
    %1295 = vmatprep.mubr.f32.mxu0 0.0
    %1296 = vmatmul.mubr.f32.gmra.mrb[0].mxu0 %v1068
    %v1297 = vpop.f32.mrb[0].mxu0
    %v1298 = vadd.f32 %v995, %v1297
    %v1299 = vpop.f32.mrb[0].mxu0
    %1300 = vmatprep.mubr.f32.mxu0 0.0
    %1301 = vmatmul.mubr.f32.gmra.mrb[0].mxu0 %v1071
    %v1302 = vpop.f32.mrb[0].mxu0
    %v1303 = vadd.f32 %v995, %v1302
    %v1304 = vpop.f32.mrb[0].mxu0
    %1305 = vmatprep.mubr.f32.mxu0 0.0
    %1306 = vmatmul.mubr.f32.gmra.mrb[0].mxu0 %v1074
    %v1307 = vpop.f32.mrb[0].mxu0
    %v1308 = vadd.f32 %v995, %v1307
    %v1309 = vpop.f32.mrb[0].mxu0
    %1310 = vmatprep.mubr.f32.mxu0 0.0
    %1311 = vmatmul.mubr.f32.gmra.mrb[0].mxu0 %v1077
    %v1312 = vpop.f32.mrb[0].mxu0
    %v1313 = vadd.f32 %v995, %v1312
    %v1314 = vpop.f32.mrb[0].mxu0
    %1315 = vmatprep.mubr.f32.mxu0 0.0
    %1316 = vmatmul.mubr.f32.gmra.mrb[0].mxu0 %v1080
    %v1317 = vpop.f32.mrb[0].mxu0
    %v1318 = vadd.f32 %v995, %v1317
    %v1319 = vpop.f32.mrb[0].mxu0
    %1320 = vmatprep.mubr.f32.mxu0 0.0
    %1321 = vmatmul.mubr.f32.gmra.mrb[0].mxu0 %v1083
    %v1322 = vpop.f32.mrb[0].mxu0
    %v1323 = vadd.f32 %v995, %v1322
    %v1324 = vpop.f32.mrb[0].mxu0
    %1325 = vmatprep.mubr.f32.mxu0 0.0
    %1326 = vmatmul.mubr.f32.gmra.mrb[0].mxu0 %v1086
    %v1327 = vpop.f32.mrb[0].mxu0
    %v1328 = vadd.f32 %v995, %v1327
    %v1329 = vpop.f32.mrb[0].mxu0
    %1330 = vmatprep.mubr.f32.mxu0 0.0
    %1331 = vmatmul.mubr.f32.gmra.mrb[0].mxu0 %v1089
    %v1332 = vpop.f32.mrb[0].mxu0
    %v1333 = vadd.f32 %v995, %v1332
    %v1334 = vpop.f32.mrb[0].mxu0
    %1335 = vmatprep.mubr.f32.mxu0 0.0
    %1336 = vmatmul.mubr.f32.gmra.mrb[0].mxu0 %v1092
    %v1337 = vpop.f32.mrb[0].mxu0
    %v1338 = vadd.f32 %v995, %v1337
    %v1339 = vpop.f32.mrb[0].mxu0
    %1340 = vmatprep.mubr.f32.mxu0 0.0
    %1341 = vmatmul.mubr.f32.gmra.mrb[0].mxu0 %v1095
    %v1342 = vpop.f32.mrb[0].mxu0
    %v1343 = vadd.f32 %v995, %v1342
    %v1344 = vpop.f32.mrb[0].mxu0
    %1345 = vmatprep.mubr.f32.mxu0 0.0
    %1346 = vmatmul.mubr.f32.gmra.mrb[0].mxu0 %v1098
    %v1347 = vpop.f32.mrb[0].mxu0
    %v1348 = vadd.f32 %v995, %v1347
    %v1349 = vpop.f32.mrb[0].mxu0
    %1350 = vmatprep.mubr.f32.mxu0 0.0
    %1351 = vmatmul.mubr.f32.gmra.mrb[0].mxu0 %v1101
    %v1352 = vpop.f32.mrb[0].mxu0
    %v1353 = vadd.f32 %v995, %v1352
    %v1354 = vpop.f32.mrb[0].mxu0
    %1355 = vmatprep.mubr.f32.mxu0 0.0
    %1356 = vmatmul.mubr.f32.gmra.mrb[0].mxu0 %v1104
    %v1357 = vpop.f32.mrb[0].mxu0
    %v1358 = vadd.f32 %v995, %v1357
    %v1359 = vpop.f32.mrb[0].mxu0
    %1360 = vmatprep.mubr.f32.mxu0 0.0
    %1361 = vmatmul.mubr.f32.gmra.mrb[0].mxu0 %v1107
    %v1362 = vpop.f32.mrb[0].mxu0
    %v1363 = vadd.f32 %v995, %v1362
    %v1364 = vpop.f32.mrb[0].mxu0
    %1365 = vmatprep.mubr.f32.mxu0 0.0
    %1366 = vmatmul.mubr.f32.gmra.mrb[0].mxu0 %v1110
    %v1367 = vpop.f32.mrb[0].mxu0
    %v1368 = vadd.f32 %v995, %v1367
    %v1369 = vpop.f32.mrb[0].mxu0
    %1370 = vdwg.mxu0
    %v1371 = vmul.f32 %v1183, 0.01
    %v1372 = vmul.f32 %v1188, 0.01
    %v1373 = vmul.f32 %v1193, 0.01
    %v1374 = vmul.f32 %v1198, 0.01
    %v1375 = vmul.f32 %v1203, 0.01
    %v1376 = vmul.f32 %v1208, 0.01
    %v1377 = vmul.f32 %v1213, 0.01
    %v1378 = vmul.f32 %v1218, 0.01
    %v1379 = vmul.f32 %v1223, 0.01
    %v1380 = vmul.f32 %v1228, 0.01
    %v1381 = vmul.f32 %v1233, 0.01
    %v1382 = vmul.f32 %v1238, 0.01
    %v1383 = vmul.f32 %v1243, 0.01
    %v1384 = vmul.f32 %v1248, 0.01
    %v1385 = vmul.f32 %v1253, 0.01
    %v1386 = vmul.f32 %v1258, 0.01
    %v1387 = vmul.f32 %v1263, 0.01
    %v1388 = vmul.f32 %v1268, 0.01
    %v1389 = vmul.f32 %v1273, 0.01
    %v1390 = vmul.f32 %v1278, 0.01
    %v1391 = vmul.f32 %v1283, 0.01
    %v1392 = vmul.f32 %v1288, 0.01
    %v1393 = vmul.f32 %v1293, 0.01
    %v1394 = vmul.f32 %v1298, 0.01
    %v1395 = vmul.f32 %v1303, 0.01
    %v1396 = vmul.f32 %v1308, 0.01
    %v1397 = vmul.f32 %v1313, 0.01
    %v1398 = vmul.f32 %v1318, 0.01
    %v1399 = vmul.f32 %v1323, 0.01
    %v1400 = vmul.f32 %v1328, 0.01
    %v1401 = vmul.f32 %v1333, 0.01
    %v1402 = vmul.f32 %v1338, 0.01
    %v1403 = vmul.f32 %v1343, 0.01
    %v1404 = vmul.f32 %v1348, 0.01
    %v1405 = vmul.f32 %v1353, 0.01
    %v1406 = vmul.f32 %v1358, 0.01
    %v1407 = vmul.f32 %v1363, 0.01
    %v1408 = vmul.f32 %v1368, 0.01
    %v1409 = vmax.f32 %v1183, %v1371
    %v1410 = vmax.f32 %v1188, %v1372
    %v1411 = vmax.f32 %v1193, %v1373
    %v1412 = vmax.f32 %v1198, %v1374
    %v1413 = vmax.f32 %v1203, %v1375
    %v1414 = vmax.f32 %v1208, %v1376
    %v1415 = vmax.f32 %v1213, %v1377
    %v1416 = vmax.f32 %v1218, %v1378
    %v1417 = vmax.f32 %v1223, %v1379
    %v1418 = vmax.f32 %v1228, %v1380
    %v1419 = vmax.f32 %v1233, %v1381
    %v1420 = vmax.f32 %v1238, %v1382
    %v1421 = vmax.f32 %v1243, %v1383
    %v1422 = vmax.f32 %v1248, %v1384
    %v1423 = vmax.f32 %v1253, %v1385
    %v1424 = vmax.f32 %v1258, %v1386
    %v1425 = vmax.f32 %v1263, %v1387
    %v1426 = vmax.f32 %v1268, %v1388
    %v1427 = vmax.f32 %v1273, %v1389
    %v1428 = vmax.f32 %v1278, %v1390
    %v1429 = vmax.f32 %v1283, %v1391
    %v1430 = vmax.f32 %v1288, %v1392
    %v1431 = vmax.f32 %v1293, %v1393
    %v1432 = vmax.f32 %v1298, %v1394
    %v1433 = vmax.f32 %v1303, %v1395
    %v1434 = vmax.f32 %v1308, %v1396
    %v1435 = vmax.f32 %v1313, %v1397
    %v1436 = vmax.f32 %v1318, %v1398
    %v1437 = vmax.f32 %v1323, %v1399
    %v1438 = vmax.f32 %v1328, %v1400
    %v1439 = vmax.f32 %v1333, %v1401
    %v1440 = vmax.f32 %v1338, %v1402
    %v1441 = vmax.f32 %v1343, %v1403
    %v1442 = vmax.f32 %v1348, %v1404
    %v1443 = vmax.f32 %v1353, %v1405
    %v1444 = vmax.f32 %v1358, %v1406
    %v1445 = vmax.f32 %v1363, %v1407
    %v1446 = vmax.f32 %v1368, %v1408
    %v1447 = vstv %s86
    %vm1448 = vcmask 80896
    %v1450 = vsel %vm1448, %v85, 0
    %v1453 = vsel %vm1448, %v1409, 0
    %v1456 = vsel %vm1448, %v1410, 0
    %v1459 = vsel %vm1448, %v1411, 0
    %v1462 = vsel %vm1448, %v1412, 0
    %v1465 = vsel %vm1448, %v1413, 0
    %v1468 = vsel %vm1448, %v1414, 0
    %v1471 = vsel %vm1448, %v1415, 0
    %v1474 = vsel %vm1448, %v1416, 0
    %v1477 = vsel %vm1448, %v1417, 0
    %v1480 = vsel %vm1448, %v1418, 0
    %v1483 = vsel %vm1448, %v1419, 0
    %v1486 = vsel %vm1448, %v1420, 0
    %v1489 = vsel %vm1448, %v1421, 0
    %v1492 = vsel %vm1448, %v1422, 0
    %v1495 = vsel %vm1448, %v1423, 0
    %v1498 = vsel %vm1448, %v1424, 0
    %v1501 = vsel %vm1448, %v1425, 0
    %v1504 = vsel %vm1448, %v1426, 0
    %v1507 = vsel %vm1448, %v1427, 0
    %v1510 = vsel %vm1448, %v1428, 0
    %v1513 = vsel %vm1448, %v1429, 0
    %v1516 = vsel %vm1448, %v1430, 0
    %v1519 = vsel %vm1448, %v1431, 0
    %v1522 = vsel %vm1448, %v1432, 0
    %v1525 = vsel %vm1448, %v1433, 0
    %v1528 = vsel %vm1448, %v1434, 0
    %v1531 = vsel %vm1448, %v1435, 0
    %v1534 = vsel %vm1448, %v1436, 0
    %v1537 = vsel %vm1448, %v1437, 0
    %v1540 = vsel %vm1448, %v1438, 0
    %v1543 = vsel %vm1448, %v1439, 0
    %v1546 = vsel %vm1448, %v1440, 0
    %v1549 = vsel %vm1448, %v1441, 0
    %v1552 = vsel %vm1448, %v1442, 0
    %v1555 = vsel %vm1448, %v1443, 0
    %v1558 = vsel %vm1448, %v1444, 0
    %v1561 = vsel %vm1448, %v1445, 0
    %v1564 = vsel %vm1448, %v1446, 0
    %1566 = vmatprep.subr.mxu0 0.0
    %1567 = vmatpush1.xpose.msra.mxu0 %v1453
    %1568 = vmatprep.subr.mxu0 0.0
    %1569 = vmatpush1.xpose.msra.mxu0 %v1456
    %1570 = vmatprep.subr.mxu0 0.0
    %1571 = vmatpush1.xpose.msra.mxu0 %v1459
    %1572 = vmatprep.subr.mxu0 0.0
    %1573 = vmatpush1.xpose.msra.mxu0 %v1462
    %1574 = vmatprep.subr.mxu0 0.0
    %1575 = vmatpush1.xpose.msra.mxu0 %v1465
    %1576 = vmatprep.subr.mxu0 0.0
    %1577 = vmatpush1.xpose.msra.mxu0 %v1468
    %1578 = vmatprep.subr.mxu0 0.0
    %1579 = vmatpush1.xpose.msra.mxu0 %v1471
    %1580 = vmatprep.subr.mxu0 0.0
    %1581 = vmatpush1.xpose.msra.mxu0 %v1474
    %1582 = vmatprep.subr.mxu0 0.0
    %1583 = vmatpush1.xpose.msra.mxu0 %v1477
    %1584 = vmatprep.subr.mxu0 0.0
    %1585 = vmatpush1.xpose.msra.mxu0 %v1480
    %1586 = vmatprep.subr.mxu0 0.0
    %1587 = vmatpush1.xpose.msra.mxu0 %v1483
    %1588 = vmatprep.subr.mxu0 0.0
    %1589 = vmatpush1.xpose.msra.mxu0 %v1486
    %1590 = vmatprep.subr.mxu0 0.0
    %1591 = vmatpush1.xpose.msra.mxu0 %v1489
    %1592 = vmatprep.subr.mxu0 0.0
    %1593 = vmatpush1.xpose.msra.mxu0 %v1492
    %1594 = vmatprep.subr.mxu0 0.0
    %1595 = vmatpush1.xpose.msra.mxu0 %v1495
    %1596 = vmatprep.subr.mxu0 0.0
    %1597 = vmatpush1.xpose.msra.mxu0 %v1498
    %1598 = vmatprep.subr.mxu0 0.0
    %1599 = vmatpush1.xpose.msra.mxu0 %v1501
    %1600 = vmatprep.subr.mxu0 0.0
    %1601 = vmatpush1.xpose.msra.mxu0 %v1504
    %1602 = vmatprep.subr.mxu0 0.0
    %1603 = vmatpush1.xpose.msra.mxu0 %v1507
    %1604 = vmatprep.subr.mxu0 0.0
    %1605 = vmatpush1.xpose.msra.mxu0 %v1510
    %1606 = vmatprep.subr.mxu0 0.0
    %1607 = vmatpush1.xpose.msra.mxu0 %v1513
    %1608 = vmatprep.subr.mxu0 0.0
    %1609 = vmatpush1.xpose.msra.mxu0 %v1516
    %1610 = vmatprep.subr.mxu0 0.0
    %1611 = vmatpush1.xpose.msra.mxu0 %v1519
    %1612 = vmatprep.subr.mxu0 0.0
    %1613 = vmatpush1.xpose.msra.mxu0 %v1522
    %1614 = vmatprep.subr.mxu0 0.0
    %1615 = vmatpush1.xpose.msra.mxu0 %v1525
    %1616 = vmatprep.subr.mxu0 0.0
    %1617 = vmatpush1.xpose.msra.mxu0 %v1528
    %1618 = vmatprep.subr.mxu0 0.0
    %1619 = vmatpush1.xpose.msra.mxu0 %v1531
    %1620 = vmatprep.subr.mxu0 0.0
    %1621 = vmatpush1.xpose.msra.mxu0 %v1534
    %1622 = vmatprep.subr.mxu0 0.0
    %1623 = vmatpush1.xpose.msra.mxu0 %v1537
    %1624 = vmatprep.subr.mxu0 0.0
    %1625 = vmatpush1.xpose.msra.mxu0 %v1540
    %1626 = vmatprep.subr.mxu0 0.0
    %1627 = vmatpush1.xpose.msra.mxu0 %v1543
    %1628 = vmatprep.subr.mxu0 0.0
    %1629 = vmatpush1.xpose.msra.mxu0 %v1546
    %1630 = vmatprep.mubr.f32.mxu0 0.0
    %1631 = vmatmul.mubr.f32.gmra.mrb[0].mxu0 %v1450
    %v1632 = vpop.f32.mrb[0].mxu0
    %v1633 = vadd.f32 %v1447, %v1632
    %v1634 = vpop.f32.mrb[0].mxu0
    %v1635 = vadd.f32 %v1447, %v1634
    %1636 = vdwg.mxu0
    %1637 = vmatprep.subr.mxu0 0.0
    %1638 = vmatpush1.xpose.msra.mxu0 %v1549
    %1639 = vmatprep.subr.mxu0 0.0
    %1640 = vmatpush1.xpose.msra.mxu0 %v1552
    %1641 = vmatprep.subr.mxu0 0.0
    %1642 = vmatpush1.xpose.msra.mxu0 %v1555
    %1643 = vmatprep.subr.mxu0 0.0
    %1644 = vmatpush1.xpose.msra.mxu0 %v1558
    %1645 = vmatprep.subr.mxu0 0.0
    %1646 = vmatpush1.xpose.msra.mxu0 %v1561
    %1647 = vmatprep.subr.mxu0 0.0
    %1648 = vmatpush1.xpose.msra.mxu0 %v1564
    %1649 = vmatprep.subr.mxu0 0.0
    %1650 = vmatpush1.xpose.msra.mxu0 0.0
    %1651 = vmatprep.subr.mxu0 0.0
    %1652 = vmatpush1.xpose.msra.mxu0 0.0
    %1653 = vmatprep.subr.mxu0 0.0
    %1654 = vmatpush1.xpose.msra.mxu0 0.0
    %1655 = vmatprep.subr.mxu0 0.0
    %1656 = vmatpush1.xpose.msra.mxu0 0.0
    %1657 = vmatprep.subr.mxu0 0.0
    %1658 = vmatpush1.xpose.msra.mxu0 0.0
    %1659 = vmatprep.subr.mxu0 0.0
    %1660 = vmatpush1.xpose.msra.mxu0 0.0
    %1661 = vmatprep.subr.mxu0 0.0
    %1662 = vmatpush1.xpose.msra.mxu0 0.0
    %1663 = vmatprep.subr.mxu0 0.0
    %1664 = vmatpush1.xpose.msra.mxu0 0.0
    %1665 = vmatprep.subr.mxu0 0.0
    %1666 = vmatpush1.xpose.msra.mxu0 0.0
    %1667 = vmatprep.subr.mxu0 0.0
    %1668 = vmatpush1.xpose.msra.mxu0 0.0
    %1669 = vmatprep.subr.mxu0 0.0
    %1670 = vmatpush1.xpose.msra.mxu0 0.0
    %1671 = vmatprep.subr.mxu0 0.0
    %1672 = vmatpush1.xpose.msra.mxu0 0.0
    %1673 = vmatprep.subr.mxu0 0.0
    %1674 = vmatpush1.xpose.msra.mxu0 0.0
    %1675 = vmatprep.subr.mxu0 0.0
    %1676 = vmatpush1.xpose.msra.mxu0 0.0
    %1677 = vmatprep.subr.mxu0 0.0
    %1678 = vmatpush1.xpose.msra.mxu0 0.0
    %1679 = vmatprep.subr.mxu0 0.0
    %1680 = vmatpush1.xpose.msra.mxu0 0.0
    %1681 = vmatprep.subr.mxu0 0.0
    %1682 = vmatpush1.xpose.msra.mxu0 0.0
    %1683 = vmatprep.subr.mxu0 0.0
    %1684 = vmatpush1.xpose.msra.mxu0 0.0
    %1685 = vmatprep.subr.mxu0 0.0
    %1686 = vmatpush1.xpose.msra.mxu0 0.0
    %1687 = vmatprep.subr.mxu0 0.0
    %1688 = vmatpush1.xpose.msra.mxu0 0.0
    %1689 = vmatprep.subr.mxu0 0.0
    %1690 = vmatpush1.xpose.msra.mxu0 0.0
    %1691 = vmatprep.subr.mxu0 0.0
    %1692 = vmatpush1.xpose.msra.mxu0 0.0
    %1693 = vmatprep.subr.mxu0 0.0
    %1694 = vmatpush1.xpose.msra.mxu0 0.0
    %1695 = vmatprep.subr.mxu0 0.0
    %1696 = vmatpush1.xpose.msra.mxu0 0.0
    %1697 = vmatprep.subr.mxu0 0.0
    %1698 = vmatpush1.xpose.msra.mxu0 0.0
    %1699 = vmatprep.subr.mxu0 0.0
    %1700 = vmatpush1.xpose.msra.mxu0 0.0
    %1701 = vmatprep.mubr.f32.mxu0 0.0
    %1702 = vmatmul.mubr.f32.gmra.mrb[0].mxu0 %v1450
    %v1703 = vpop.f32.mrb[0].mxu0
    %v1704 = vadd.f32 %v1447, %v1703
    %v1705 = vpop.f32.mrb[0].mxu0
    %1706 = vdwg.mxu0
    %v1710 = vcombine.low %v1633, %v1635
    %v1712 = vunpack.c.l.s4 1966171168
    %v1713 = vunpack.c.0.s8 %v1712
    %v1714 = vlaneseq
    %v1715 = vshrl.u32 %v1714, 7
    %v1716 = vsub.s32 %v1713, %v1715
    %v1717 = vrot.slane %v1710, %v1716
    %v1719 = vunpack.c.l.s4 1966171168
    %v1720 = vunpack.c.0.s8 %v1719
    %v1721 = vlaneseq
    %v1722 = vshrl.u32 %v1721, 7
    %v1723 = vsub.s32 %v1720, %v1722
    %v1724 = vrot.slane %v1704, %v1723
    %v1725 = vcombine.low %v1717, %v1724
    %v1727 = vunpack.c.l.s4 1966171168
    %v1728 = vunpack.c.0.s8 %v1727
    %v1729 = vlaneseq
    %v1730 = vshrl.u32 %v1729, 7
    %v1731 = vsub.s32 %v1728, %v1730
    %v1732 = vrot.slane %v1725, %v1731
    %v1734 = vlaneseq
    %vm1735 = vcmp.ge.s32.totalorder %v1734, 0
    %vm1736 = vcmp.lt.s32.totalorder %v1734, 300
    %vm1737 = vmand %vm1735, %vm1736
    %1738 = vst.msk [vmem:[#allocation3] sm:$0x7] %vm1737, %v1732
    // Predicated region
    $region38: #{tpu_custom_call.1} parent=1 // pred_check
      _
    $region39: #{tpu_custom_call.1} parent=1 // pred_check_branch
      %1740 = sbr.rel (0) target = $region41
    $region40: #{tpu_custom_call.1} parent=1 // pred_region
      %s1742 = ssub.s32 48, 48
      %1743 = vsyncadd [#allocation4], %s1742
      %s1745 = sshll.u32 [#allocation3], 4
      %s1746 = int_to_ptr.vmem [resolvable:$true] %s1745
      %1748 = dma.vmem_to_hbm [thread:$0]  %s1746, 48, %s9, [#allocation4]
    $region41: #{tpu_custom_call.1} parent=1 // pred_fallthru
      _
    // Predicated region
    $region42: #{tpu_custom_call.1} parent=1 // pred_check
      _
    $region43: #{tpu_custom_call.1} parent=1 // pred_check_branch
      %1750 = sbr.rel (0) target = $region45
    $region44: #{tpu_custom_call.1} parent=1 // pred_region
      %1751 = dma.done [#allocation4], 48
    $region45: #{tpu_custom_call.1} parent=1 // pred_fallthru
      _
    %1752 = vsyncpa [#allocation4], 1

</llo_original>
